<compile_context>
chip_gen: v5e
topology: v5e:2x2
jax: 0.10.0
libtpu: 0.0.40
codegen_flags: <defaults>
</compile_context>

<pallas_src>
import functools
import math

import numpy as np
import jax
import jax.numpy as jnp
from jax.experimental import pallas as pl
from jax.experimental.pallas import tpu as pltpu


# ----------------------------- helpers ---------------------------------------

def _layernorm(x, gamma, beta, eps):
    mean = jnp.mean(x, axis=-1, keepdims=True)
    var = jnp.mean((x - mean) ** 2, axis=-1, keepdims=True)
    return (x - mean) * jax.lax.rsqrt(var + eps) * gamma + beta


@functools.lru_cache(maxsize=16)
def _fused_dft_matrices(S, D):
    """Host-precomputed (numpy) fused real-DFT matrices, cached per (S, D).

    Returns [Cd | Sd] of shape (D, 2D) and [Cs | -Ss] of shape (S, 2S), bf16.
    """
    def cos_sin(n):
        idx = np.arange(n, dtype=np.int64)
        # mod n in integers keeps angles small for good accuracy.
        ang = (2.0 * np.pi / n) * ((idx[:, None] * idx[None, :]) % n).astype(np.float64)
        return np.cos(ang), np.sin(ang)

    cs, ss = cos_sin(S)
    cd, sd = cos_sin(D)
    cdsd = jnp.asarray(np.concatenate([cd, sd], axis=1), dtype=jnp.bfloat16)   # x @ [Cd | Sd]
    csss = jnp.asarray(np.concatenate([cs, -ss], axis=1), dtype=jnp.bfloat16)  # [Cs | -Ss] @ [xc ; xs]
    return cdsd, csss


def _vmem_limit_bytes():
    """Generation-aware VMEM request: headroom below physical capacity."""
    try:
        cap = int(pltpu.get_tpu_info().vmem_capacity_bytes)
    except Exception:
        cap = 128 * 1024 * 1024
    # ~48 MiB on v7x (64 MiB physical), up to 112 MiB on v5e/v6e (128 MiB).
    return int(min(max(cap - 16 * 1024 * 1024, 32 * 1024 * 1024),
                   112 * 1024 * 1024))


# ------------------------------ kernel ----------------------------------------

def fnet_layer_kernel(x_ref, cdsd_ref, csss_ref,
                      w1_ref, b1_ref, w2_ref, b2_ref,
                      g1_ref, be1_ref, g2_ref, be2_ref,
                      o_ref, xcs_ref, *, eps, gelu_approximate):
    S, D = x_ref.shape            # full sequence slab for this batch
    TS = o_ref.shape[0]           # sequence tile handled by this grid step
    n_chunks = S // TS            # static
    j = pl.program_id(1)          # seq-tile index (inner, "arbitrary" axis)

    # ---- Stage 1 (once per batch): hidden-dim DFT into persistent scratch ----
    #   [xc | xs] = x @ [Cd | Sd], stored stacked as rows [xc ; xs] in bf16.
    #   Computed in TS-row chunks to bound the f32 intermediate to (TS, 2D).
    @pl.when(j == 0)
    def _():
        def chunk(r0):
            if not isinstance(r0, int):
                r0 = pl.multiple_of(r0, TS)
            xb = x_ref[pl.ds(r0, TS), :].astype(jnp.bfloat16)          # (TS, D)
            xcs = jnp.dot(xb, cdsd_ref[...],
                          preferred_element_type=jnp.float32)          # (TS, 2D) f32
            xcs_ref[pl.ds(r0, TS), :] = xcs[:, :D].astype(jnp.bfloat16)      # xc rows
            xcs_ref[pl.ds(S + r0, TS), :] = xcs[:, D:].astype(jnp.bfloat16)  # xs rows

        if n_chunks == 1:
            chunk(0)
        else:
            def body(c, carry):
                chunk(c * TS)
                return carry
            jax.lax.fori_loop(0, n_chunks, body, 0, unroll=n_chunks <= 4)

    # ---- Stage 2 (per seq tile): seq-dim DFT, real part only ----
    #   fft_tile = [Cs | -Ss](tile rows) @ [xc ; xs]
    fft_tile = jnp.dot(csss_ref[...], xcs_ref[...],
                       preferred_element_type=jnp.float32)             # (TS, D) f32

    r0 = pl.multiple_of(j * TS, TS)
    x_tile = x_ref[pl.ds(r0, TS), :]                                   # (TS, D) f32

    # ---- residual + mixing LayerNorm (f32 elementwise) ----
    h = _layernorm(fft_tile + x_tile, g1_ref[...], be1_ref[...], eps)

    # ---- feed-forward: Linear -> GELU -> Linear (bf16 MXU, f32 accum) ----
    inter = jnp.dot(h.astype(jnp.bfloat16), w1_ref[...],
                    preferred_element_type=jnp.float32) + b1_ref[...]  # (TS, I)
    # approximate=True routes the transcendental to the EUP (separate VLIW slot);
    # approximate=False matches nn.GELU() exact erf semantics.
    inter = jax.nn.gelu(inter, approximate=gelu_approximate)
    out = jnp.dot(inter.astype(jnp.bfloat16), w2_ref[...],
                  preferred_element_type=jnp.float32) + b2_ref[...]    # (TS, D)

    # dropout: identity (eval mode / rate 0.0)
    # ---- residual + output LayerNorm ----
    out = _layernorm(out + h, g2_ref[...], be2_ref[...], eps)
    o_ref[...] = out.astype(o_ref.dtype)


# ------------------------------ wrapper ---------------------------------------

_SINGLE_BUFFER_OK = True  # flipped off if this jax build rejects pl.Buffered(1)


def _build_fnet_call(B, S, D, I, seq_tile, eps, gelu_approximate, out_dtype,
                     vmem_limit, single_buffer):
    n_tiles = S // seq_tile
    pm = pl.Buffered(1) if single_buffer else None   # single-buffer grid-invariant operands

    def const2d(shape):
        return pl.BlockSpec(shape, lambda b, j: (0, 0), pipeline_mode=pm)

    kernel = functools.partial(fnet_layer_kernel, eps=eps,
                               gelu_approximate=gelu_approximate)

    return pl.pallas_call(
        kernel,
        out_shape=jax.ShapeDtypeStruct((B, S, D), out_dtype),
        grid_spec=pltpu.PrefetchScalarGridSpec(
            num_scalar_prefetch=0,
            grid=(B, n_tiles),
            in_specs=[
                # x: full sequence of this batch, resident across seq tiles;
                # only re-fetched when b changes, so single-buffer it too.
                pl.BlockSpec((None, S, D), lambda b, j: (b, 0, 0), pipeline_mode=pm),
                const2d((D, 2 * D)),                                   # [Cd | Sd]
                pl.BlockSpec((seq_tile, 2 * S), lambda b, j: (j, 0)),  # [Cs | -Ss] tile (streamed)
                const2d((D, I)), const2d((1, I)),                      # w1, b1
                const2d((I, D)), const2d((1, D)),                      # w2, b2
                const2d((1, D)), const2d((1, D)),                      # gamma1, beta1
                const2d((1, D)), const2d((1, D)),                      # gamma2, beta2
            ],
            out_specs=pl.BlockSpec((None, seq_tile, D), lambda b, j: (b, j, 0)),
            scratch_shapes=[pltpu.VMEM((2 * S, D), jnp.bfloat16)],     # [xc ; xs]
        ),
        compiler_params=pltpu.CompilerParams(
            dimension_semantics=("parallel", "arbitrary"),
            vmem_limit_bytes=vmem_limit,
        ),
    )


def fnet_layer(x, params, *, eps=1e-12, seq_tile=None, gelu_approximate=True,
               out_dtype=None):
    """Fused FNet layer forward. x: (B, S, D) f32."""
    global _SINGLE_BUFFER_OK
    B, S, D = x.shape
    I = params["w1"].shape[1]
    out_dtype = jnp.float32 if out_dtype is None else out_dtype

    vmem_limit = _vmem_limit_bytes()

    if seq_tile is None:
        # Bigger tiles on 128-MiB parts (v5e/v6e), smaller under v7x's 64 MiB.
        target = 256 if vmem_limit >= 96 * 1024 * 1024 else 128
        if S <= target or S % 128 != 0:
            seq_tile = S
        elif target == 256 and S % 256 == 0:
            seq_tile = 256
        else:
            seq_tile = 128
    assert S % seq_tile == 0, (S, seq_tile)
    assert seq_tile == S or seq_tile % 8 == 0, seq_tile

    cdsd, csss = _fused_dft_matrices(S, D)   # host-precomputed, cached, bf16
    args = (x, cdsd, csss,
            params["w1"].astype(jnp.bfloat16), params["b1"],
            params["w2"].astype(jnp.bfloat16), params["b2"],
            params["g1"], params["be1"], params["g2"], params["be2"])

    if _SINGLE_BUFFER_OK:
        try:
            call = _build_fnet_call(B, S, D, I, seq_tile, eps, gelu_approximate,
                                    out_dtype, vmem_limit, single_buffer=True)
            return call(*args)
        except Exception:
            # Older jax builds may reject pipeline_mode=pl.Buffered(1);
            # fall back to default double-buffering.
            _SINGLE_BUFFER_OK = False
    call = _build_fnet_call(B, S, D, I, seq_tile, eps, gelu_approximate,
                            out_dtype, vmem_limit, single_buffer=False)
    return call(*args)


# ----------------------------- references -------------------------------------

def fnet_layer_ref_exact(x, params, *, eps=1e-12):
    """Pure-JAX f32 reference mirroring the PyTorch module (eval, exact-erf GELU)."""
    fft_out = jnp.real(jnp.fft.fft(jnp.fft.fft(x, axis=-1), axis=-2)).astype(jnp.float32)
    h = _layernorm(fft_out + x, params["g1"], params["be1"], eps)
    inter = jax.nn.gelu(h @ params["w1"] + params["b1"], approximate=False)
    out = inter @ params["w2"] + params["b2"]
    return _layernorm(out + h, params["g2"], params["be2"], eps)


def fnet_layer_ref_matched(x, params, *, eps=1e-12, gelu_approximate=True):
    """Pure-JAX reference with the SAME bf16-operand / f32-accum math as the kernel."""
    B, S, D = x.shape
    cdsd, csss = _fused_dft_matrices(S, D)
    w1 = params["w1"].astype(jnp.bfloat16)
    w2 = params["w2"].astype(jnp.bfloat16)

    xcs = jnp.einsum("bsd,dk->bsk", x.astype(jnp.bfloat16), cdsd,
                     preferred_element_type=jnp.float32)                      # (B, S, 2D)
    stacked = jnp.concatenate([xcs[..., :D], xcs[..., D:]],
                              axis=1).astype(jnp.bfloat16)                    # (B, 2S, D)
    fft_real = jnp.einsum("tk,bkd->btd", csss, stacked,
                          preferred_element_type=jnp.float32)                 # (B, S, D)

    h = _layernorm(fft_real + x, params["g1"], params["be1"], eps)
    inter = jnp.einsum("bsd,di->bsi", h.astype(jnp.bfloat16), w1,
                       preferred_element_type=jnp.float32) + params["b1"]
    inter = jax.nn.gelu(inter, approximate=gelu_approximate)
    out = jnp.einsum("bsi,id->bsd", inter.astype(jnp.bfloat16), w2,
                     preferred_element_type=jnp.float32) + params["b2"]
    return _layernorm(out + h, params["g2"], params["be2"], eps)


# ------------------------------- demo ------------------------------------------

if __name__ == "__main__":
    def make_params(key, D, I):
        k1, k2, k3, k4 = jax.random.split(key, 4)
        return {
            "w1": jax.random.normal(k1, (D, I), dtype=jnp.float32) * 0.05,
            "b1": jax.random.normal(k2, (1, I), dtype=jnp.float32) * 0.05,
            "w2": jax.random.normal(k3, (I, D), dtype=jnp.float32) * 0.05,
            "b2": jax.random.normal(k4, (1, D), dtype=jnp.float32) * 0.05,
            "g1": jnp.ones((1, D), dtype=jnp.float32),
            "be1": jnp.zeros((1, D), dtype=jnp.float32),
            "g2": jnp.ones((1, D), dtype=jnp.float32),
            "be2": jnp.zeros((1, D), dtype=jnp.float32),
        }

    key = jax.random.PRNGKey(0)

    # Config A: module-consistent tiny config (seq=8, hidden=32, intermediate=64).
    # Config B: aligned config exercising the multi-seq-tile + chunked-stage-1 path.
    configs = [
        (2, 8, 32, 64, None),     # -> 1 seq tile
        (2, 256, 128, 256, 128),  # -> 2 seq tiles, scratch reused across tiles
    ]

    for (B, S, D, I, ts) in configs:
        key, kx, kp = jax.random.split(key, 3)
        x = jax.random.normal(kx, (B, S, D), dtype=jnp.float32)
        params = make_params(kp, D, I)

        out = jax.block_until_ready(fnet_layer(x, params, seq_tile=ts))
        ref_m = jax.block_until_ready(fnet_layer_ref_matched(x, params))
        ref_e = jax.block_until_ready(fnet_layer_ref_exact(x, params))

        assert out.shape == (B, S, D)
        # Tight check against the precision-matched reference (same bf16/f32 math,
        # same tanh-GELU); slack only for MXU reduction-order / rounding flips.
        err_m = float(jnp.max(jnp.abs(out - ref_m)))
        assert jnp.allclose(out, ref_m, atol=5e-3, rtol=5e-3), (B, S, D, I, err_m)
        # Relative-Frobenius check against the exact f32 FFT / exact-erf reference;
        # the gap reflects bf16 rounding of the DFT/matmul operands + tanh GELU.
        rel = float(jnp.linalg.norm(out - ref_e) / jnp.linalg.norm(ref_e))
        assert rel < 3e-2, (B, S, D, I, rel)

    print("KERNEL_OK")
</pallas_src>

<mosaic_0001>
module attributes {stable_mosaic.version = 11 : i64} {
  func.func @fnet_layer_kernel(%arg0: i32, %arg1: i32, %arg2: memref<1x8x32xf32, #tpu.memory_space<vmem>>, %arg3: memref<32x64xbf16, #tpu.memory_space<vmem>>, %arg4: memref<8x16xbf16, #tpu.memory_space<vmem>>, %arg5: memref<32x64xbf16, #tpu.memory_space<vmem>>, %arg6: memref<1x64xf32, #tpu.memory_space<vmem>>, %arg7: memref<64x32xbf16, #tpu.memory_space<vmem>>, %arg8: memref<1x32xf32, #tpu.memory_space<vmem>>, %arg9: memref<1x32xf32, #tpu.memory_space<vmem>>, %arg10: memref<1x32xf32, #tpu.memory_space<vmem>>, %arg11: memref<1x32xf32, #tpu.memory_space<vmem>>, %arg12: memref<1x32xf32, #tpu.memory_space<vmem>>, %arg13: memref<1x8x32xf32, #tpu.memory_space<vmem>>, %arg14: memref<16x32xbf16, #tpu.memory_space<vmem>>) attributes {dimension_semantics = [#tpu.dimension_semantics<parallel>, #tpu.dimension_semantics<arbitrary>], iteration_bounds = array<i64: 2, 1>, scalar_prefetch = 0 : i64, scratch_operands = 1 : i64, tpu.core_type = #tpu.core_type<tc>, window_params = [{pipeline_mode = #tpu.pipeline_mode<synchronous>, transform_indices = @transform_0, window_bounds = array<i64: 1, 8, 32>}, {pipeline_mode = #tpu.pipeline_mode<synchronous>, transform_indices = @transform_1, window_bounds = array<i64: 32, 64>}, {transform_indices = @transform_2, window_bounds = array<i64: 8, 16>}, {pipeline_mode = #tpu.pipeline_mode<synchronous>, transform_indices = @transform_3, window_bounds = array<i64: 32, 64>}, {pipeline_mode = #tpu.pipeline_mode<synchronous>, transform_indices = @transform_4, window_bounds = array<i64: 1, 64>}, {pipeline_mode = #tpu.pipeline_mode<synchronous>, transform_indices = @transform_5, window_bounds = array<i64: 64, 32>}, {pipeline_mode = #tpu.pipeline_mode<synchronous>, transform_indices = @transform_6, window_bounds = array<i64: 1, 32>}, {pipeline_mode = #tpu.pipeline_mode<synchronous>, transform_indices = @transform_7, window_bounds = array<i64: 1, 32>}, {pipeline_mode = #tpu.pipeline_mode<synchronous>, transform_indices = @transform_8, window_bounds = array<i64: 1, 32>}, {pipeline_mode = #tpu.pipeline_mode<synchronous>, transform_indices = @transform_9, window_bounds = array<i64: 1, 32>}, {pipeline_mode = #tpu.pipeline_mode<synchronous>, transform_indices = @transform_10, window_bounds = array<i64: 1, 32>}, {transform_indices = @transform_11, window_bounds = array<i64: 1, 8, 32>}]} {
    %c0_i32 = arith.constant 0 : i32
    %0 = arith.cmpi eq, %arg1, %c0_i32 : i32
    %1 = arith.extui %0 : i1 to i32
    %c0_i32_0 = arith.constant 0 : i32
    %2 = arith.cmpi ne, %1, %c0_i32_0 : i32
    scf.if %2 {
      %c0_41 = arith.constant 0 : index
      %c0_42 = arith.constant 0 : index
      %c0_43 = arith.constant 0 : index
      %89 = vector.load %arg2[%c0_41, %c0_42, %c0_43] : memref<1x8x32xf32, #tpu.memory_space<vmem>>, vector<1x8x32xf32>
      %90 = vector.shape_cast %89 : vector<1x8x32xf32> to vector<8x32xf32>
      %91 = arith.truncf %90 : vector<8x32xf32> to vector<8x32xbf16>
      %c0_44 = arith.constant 0 : index
      %c0_45 = arith.constant 0 : index
      %92 = vector.load %arg3[%c0_44, %c0_45] : memref<32x64xbf16, #tpu.memory_space<vmem>>, vector<32x64xbf16>
      %cst_46 = arith.constant dense<0.000000e+00> : vector<8x64xf32>
      %93 = tpu.matmul %91, %92, %cst_46 {dimension_numbers = #tpu.dot_dimension_numbers<[1], [0], [0], [1], [0, 0, 1, 1], [], []>} : vector<8x32xbf16>, vector<32x64xbf16>, vector<8x64xf32> -> vector<8x64xf32>
      %94 = vector.extract_strided_slice %93 {offsets = [0, 0], sizes = [8, 32], strides = [1, 1]} : vector<8x64xf32> to vector<8x32xf32>
      %95 = arith.truncf %94 : vector<8x32xf32> to vector<8x32xbf16>
      %c0_47 = arith.constant 0 : index
      %c0_48 = arith.constant 0 : index
      %96 = vector.load %arg14[%c0_47, %c0_48] : memref<16x32xbf16, #tpu.memory_space<vmem>>, vector<8x32xbf16>
      tpu.vector_store %arg14[%c0_47, %c0_48], %95 {strides = array<i32>} : memref<16x32xbf16, #tpu.memory_space<vmem>>, vector<8x32xbf16>,
      %97 = vector.extract_strided_slice %93 {offsets = [0, 32], sizes = [8, 32], strides = [1, 1]} : vector<8x64xf32> to vector<8x32xf32>
      %98 = arith.truncf %97 : vector<8x32xf32> to vector<8x32xbf16>
      %c8 = arith.constant 8 : index
      %c0_49 = arith.constant 0 : index
      %99 = vector.load %arg14[%c8, %c0_49] : memref<16x32xbf16, #tpu.memory_space<vmem>>, vector<8x32xbf16>
      tpu.vector_store %arg14[%c8, %c0_49], %98 {strides = array<i32>} : memref<16x32xbf16, #tpu.memory_space<vmem>>, vector<8x32xbf16>,
    } else {
    }
    %c0 = arith.constant 0 : index
    %c0_1 = arith.constant 0 : index
    %3 = vector.load %arg4[%c0, %c0_1] : memref<8x16xbf16, #tpu.memory_space<vmem>>, vector<8x16xbf16>
    %c0_2 = arith.constant 0 : index
    %c0_3 = arith.constant 0 : index
    %4 = vector.load %arg14[%c0_2, %c0_3] : memref<16x32xbf16, #tpu.memory_space<vmem>>, vector<16x32xbf16>
    %cst = arith.constant dense<0.000000e+00> : vector<8x32xf32>
    %5 = tpu.matmul %3, %4, %cst {dimension_numbers = #tpu.dot_dimension_numbers<[1], [0], [0], [1], [0, 0, 1, 1], [], []>} : vector<8x16xbf16>, vector<16x32xbf16>, vector<8x32xf32> -> vector<8x32xf32>
    %c8_i32 = arith.constant 8 : i32
    %6 = arith.muli %arg1, %c8_i32 : i32
    %7 = tpu.assume_multiple %6, 8 : i32
    %c0_4 = arith.constant 0 : index
    %8 = arith.index_cast %7 : i32 to index
    %c0_5 = arith.constant 0 : index
    %9 = vector.load %arg2[%c0_4, %8, %c0_5] : memref<1x8x32xf32, #tpu.memory_space<vmem>>, vector<1x8x32xf32>
    %10 = vector.shape_cast %9 : vector<1x8x32xf32> to vector<8x32xf32>
    %11 = arith.addf %5, %10 : vector<8x32xf32>
    %c0_6 = arith.constant 0 : index
    %c0_7 = arith.constant 0 : index
    %12 = vector.load %arg9[%c0_6, %c0_7] : memref<1x32xf32, #tpu.memory_space<vmem>>, vector<1x32xf32>
    %c0_8 = arith.constant 0 : index
    %c0_9 = arith.constant 0 : index
    %13 = vector.load %arg10[%c0_8, %c0_9] : memref<1x32xf32, #tpu.memory_space<vmem>>, vector<1x32xf32>
    %cst_10 = arith.constant dense<0.000000e+00> : vector<8xf32>
    %14 = vector.multi_reduction <add>, %11, %cst_10 [1] : vector<8x32xf32> to vector<8xf32>
    %15 = vector.shape_cast %14 : vector<8xf32> to vector<8x1xf32>
    %cst_11 = arith.constant 3.200000e+01 : f32
    %16 = vector.broadcast %cst_11 : f32 to vector<8x1xf32>
    %17 = arith.divf %15, %16 : vector<8x1xf32>
    %18 = vector.broadcast %17 : vector<8x1xf32> to vector<8x32xf32>
    %19 = arith.subf %11, %18 : vector<8x32xf32>
    %20 = arith.mulf %19, %19 : vector<8x32xf32>
    %cst_12 = arith.constant dense<0.000000e+00> : vector<8xf32>
    %21 = vector.multi_reduction <add>, %20, %cst_12 [1] : vector<8x32xf32> to vector<8xf32>
    %22 = vector.shape_cast %21 : vector<8xf32> to vector<8x1xf32>
    %cst_13 = arith.constant 3.200000e+01 : f32
    %23 = vector.broadcast %cst_13 : f32 to vector<8x1xf32>
    %24 = arith.divf %22, %23 : vector<8x1xf32>
    %25 = vector.broadcast %17 : vector<8x1xf32> to vector<8x32xf32>
    %26 = arith.subf %11, %25 : vector<8x32xf32>
    %cst_14 = arith.constant 9.99999996E-13 : f32
    %27 = vector.broadcast %cst_14 : f32 to vector<8x1xf32>
    %28 = arith.addf %24, %27 : vector<8x1xf32>
    %29 = math.rsqrt %28 : vector<8x1xf32>
    %30 = vector.broadcast %29 : vector<8x1xf32> to vector<8x32xf32>
    %31 = arith.mulf %26, %30 : vector<8x32xf32>
    %32 = vector.broadcast %12 : vector<1x32xf32> to vector<8x32xf32>
    %33 = arith.mulf %31, %32 : vector<8x32xf32>
    %34 = vector.broadcast %13 : vector<1x32xf32> to vector<8x32xf32>
    %35 = arith.addf %33, %34 : vector<8x32xf32>
    %36 = arith.truncf %35 : vector<8x32xf32> to vector<8x32xbf16>
    %c0_15 = arith.constant 0 : index
    %c0_16 = arith.constant 0 : index
    %37 = vector.load %arg5[%c0_15, %c0_16] : memref<32x64xbf16, #tpu.memory_space<vmem>>, vector<32x64xbf16>
    %cst_17 = arith.constant dense<0.000000e+00> : vector<8x64xf32>
    %38 = tpu.matmul %36, %37, %cst_17 {dimension_numbers = #tpu.dot_dimension_numbers<[1], [0], [0], [1], [0, 0, 1, 1], [], []>} : vector<8x32xbf16>, vector<32x64xbf16>, vector<8x64xf32> -> vector<8x64xf32>
    %c0_18 = arith.constant 0 : index
    %c0_19 = arith.constant 0 : index
    %39 = vector.load %arg6[%c0_18, %c0_19] : memref<1x64xf32, #tpu.memory_space<vmem>>, vector<1x64xf32>
    %40 = vector.broadcast %39 : vector<1x64xf32> to vector<8x64xf32>
    %41 = arith.addf %38, %40 : vector<8x64xf32>
    %42 = arith.mulf %41, %41 : vector<8x64xf32>
    %43 = arith.mulf %41, %42 : vector<8x64xf32>
    %cst_20 = arith.constant 4.471500e-02 : f32
    %44 = vector.broadcast %cst_20 : f32 to vector<8x64xf32>
    %45 = arith.mulf %44, %43 : vector<8x64xf32>
    %46 = arith.addf %41, %45 : vector<8x64xf32>
    %cst_21 = arith.constant 0.797884583 : f32
    %47 = vector.broadcast %cst_21 : f32 to vector<8x64xf32>
    %48 = arith.mulf %47, %46 : vector<8x64xf32>
    %49 = math.tanh %48 : vector<8x64xf32>
    %cst_22 = arith.constant 1.000000e+00 : f32
    %50 = vector.broadcast %cst_22 : f32 to vector<8x64xf32>
    %51 = arith.addf %50, %49 : vector<8x64xf32>
    %cst_23 = arith.constant 5.000000e-01 : f32
    %52 = vector.broadcast %cst_23 : f32 to vector<8x64xf32>
    %53 = arith.mulf %52, %51 : vector<8x64xf32>
    %54 = arith.mulf %41, %53 : vector<8x64xf32>
    %55 = arith.truncf %54 : vector<8x64xf32> to vector<8x64xbf16>
    %c0_24 = arith.constant 0 : index
    %c0_25 = arith.constant 0 : index
    %56 = vector.load %arg7[%c0_24, %c0_25] : memref<64x32xbf16, #tpu.memory_space<vmem>>, vector<64x32xbf16>
    %cst_26 = arith.constant dense<0.000000e+00> : vector<8x32xf32>
    %57 = tpu.matmul %55, %56, %cst_26 {dimension_numbers = #tpu.dot_dimension_numbers<[1], [0], [0], [1], [0, 0, 1, 1], [], []>} : vector<8x64xbf16>, vector<64x32xbf16>, vector<8x32xf32> -> vector<8x32xf32>
    %c0_27 = arith.constant 0 : index
    %c0_28 = arith.constant 0 : index
    %58 = vector.load %arg8[%c0_27, %c0_28] : memref<1x32xf32, #tpu.memory_space<vmem>>, vector<1x32xf32>
    %59 = vector.broadcast %58 : vector<1x32xf32> to vector<8x32xf32>
    %60 = arith.addf %57, %59 : vector<8x32xf32>
    %61 = arith.addf %60, %35 : vector<8x32xf32>
    %c0_29 = arith.constant 0 : index
    %c0_30 = arith.constant 0 : index
    %62 = vector.load %arg11[%c0_29, %c0_30] : memref<1x32xf32, #tpu.memory_space<vmem>>, vector<1x32xf32>
    %c0_31 = arith.constant 0 : index
    %c0_32 = arith.constant 0 : index
    %63 = vector.load %arg12[%c0_31, %c0_32] : memref<1x32xf32, #tpu.memory_space<vmem>>, vector<1x32xf32>
    %cst_33 = arith.constant dense<0.000000e+00> : vector<8xf32>
    %64 = vector.multi_reduction <add>, %61, %cst_33 [1] : vector<8x32xf32> to vector<8xf32>
    %65 = vector.shape_cast %64 : vector<8xf32> to vector<8x1xf32>
    %cst_34 = arith.constant 3.200000e+01 : f32
    %66 = vector.broadcast %cst_34 : f32 to vector<8x1xf32>
    %67 = arith.divf %65, %66 : vector<8x1xf32>
    %68 = vector.broadcast %67 : vector<8x1xf32> to vector<8x32xf32>
    %69 = arith.subf %61, %68 : vector<8x32xf32>
    %70 = arith.mulf %69, %69 : vector<8x32xf32>
    %cst_35 = arith.constant dense<0.000000e+00> : vector<8xf32>
    %71 = vector.multi_reduction <add>, %70, %cst_35 [1] : vector<8x32xf32> to vector<8xf32>
    %72 = vector.shape_cast %71 : vector<8xf32> to vector<8x1xf32>
    %cst_36 = arith.constant 3.200000e+01 : f32
    %73 = vector.broadcast %cst_36 : f32 to vector<8x1xf32>
    %74 = arith.divf %72, %73 : vector<8x1xf32>
    %75 = vector.broadcast %67 : vector<8x1xf32> to vector<8x32xf32>
    %76 = arith.subf %61, %75 : vector<8x32xf32>
    %cst_37 = arith.constant 9.99999996E-13 : f32
    %77 = vector.broadcast %cst_37 : f32 to vector<8x1xf32>
    %78 = arith.addf %74, %77 : vector<8x1xf32>
    %79 = math.rsqrt %78 : vector<8x1xf32>
    %80 = vector.broadcast %79 : vector<8x1xf32> to vector<8x32xf32>
    %81 = arith.mulf %76, %80 : vector<8x32xf32>
    %82 = vector.broadcast %62 : vector<1x32xf32> to vector<8x32xf32>
    %83 = arith.mulf %81, %82 : vector<8x32xf32>
    %84 = vector.broadcast %63 : vector<1x32xf32> to vector<8x32xf32>
    %85 = arith.addf %83, %84 : vector<8x32xf32>
    %c0_38 = arith.constant 0 : index
    %c0_39 = arith.constant 0 : index
    %c0_40 = arith.constant 0 : index
    %86 = vector.load %arg13[%c0_38, %c0_39, %c0_40] : memref<1x8x32xf32, #tpu.memory_space<vmem>>, vector<1x8x32xf32>
    %87 = vector.shape_cast %86 : vector<1x8x32xf32> to vector<8x32xf32>
    %88 = vector.shape_cast %85 : vector<8x32xf32> to vector<1x8x32xf32>
    tpu.vector_store %arg13[%c0_38, %c0_39, %c0_40], %88 {strides = array<i32>} : memref<1x8x32xf32, #tpu.memory_space<vmem>>, vector<1x8x32xf32>,
    return
  }
  func.func @transform_0(%arg0: i32, %arg1: i32) -> (i32, i32, i32) {
    %c0_i32 = arith.constant 0 : i32
    %c0_i32_0 = arith.constant 0 : i32
    %c0_i32_1 = arith.constant 0 : i32
    return %arg0, %c0_i32, %c0_i32_0 : i32, i32, i32
  }
  func.func @transform_1(%arg0: i32, %arg1: i32) -> (i32, i32) {
    %c0_i32 = arith.constant 0 : i32
    %c0_i32_0 = arith.constant 0 : i32
    %c0_i32_1 = arith.constant 0 : i32
    return %c0_i32, %c0_i32_0 : i32, i32
  }
  func.func @transform_2(%arg0: i32, %arg1: i32) -> (i32, i32) {
    %c0_i32 = arith.constant 0 : i32
    %c0_i32_0 = arith.constant 0 : i32
    return %arg1, %c0_i32 : i32, i32
  }
  func.func @transform_3(%arg0: i32, %arg1: i32) -> (i32, i32) {
    %c0_i32 = arith.constant 0 : i32
    %c0_i32_0 = arith.constant 0 : i32
    %c0_i32_1 = arith.constant 0 : i32
    return %c0_i32, %c0_i32_0 : i32, i32
  }
  func.func @transform_4(%arg0: i32, %arg1: i32) -> (i32, i32) {
    %c0_i32 = arith.constant 0 : i32
    %c0_i32_0 = arith.constant 0 : i32
    %c0_i32_1 = arith.constant 0 : i32
    return %c0_i32, %c0_i32_0 : i32, i32
  }
  func.func @transform_5(%arg0: i32, %arg1: i32) -> (i32, i32) {
    %c0_i32 = arith.constant 0 : i32
    %c0_i32_0 = arith.constant 0 : i32
    %c0_i32_1 = arith.constant 0 : i32
    return %c0_i32, %c0_i32_0 : i32, i32
  }
  func.func @transform_6(%arg0: i32, %arg1: i32) -> (i32, i32) {
    %c0_i32 = arith.constant 0 : i32
    %c0_i32_0 = arith.constant 0 : i32
    %c0_i32_1 = arith.constant 0 : i32
    return %c0_i32, %c0_i32_0 : i32, i32
  }
  func.func @transform_7(%arg0: i32, %arg1: i32) -> (i32, i32) {
    %c0_i32 = arith.constant 0 : i32
    %c0_i32_0 = arith.constant 0 : i32
    %c0_i32_1 = arith.constant 0 : i32
    return %c0_i32, %c0_i32_0 : i32, i32
  }
  func.func @transform_8(%arg0: i32, %arg1: i32) -> (i32, i32) {
    %c0_i32 = arith.constant 0 : i32
    %c0_i32_0 = arith.constant 0 : i32
    %c0_i32_1 = arith.constant 0 : i32
    return %c0_i32, %c0_i32_0 : i32, i32
  }
  func.func @transform_9(%arg0: i32, %arg1: i32) -> (i32, i32) {
    %c0_i32 = arith.constant 0 : i32
    %c0_i32_0 = arith.constant 0 : i32
    %c0_i32_1 = arith.constant 0 : i32
    return %c0_i32, %c0_i32_0 : i32, i32
  }
  func.func @transform_10(%arg0: i32, %arg1: i32) -> (i32, i32) {
    %c0_i32 = arith.constant 0 : i32
    %c0_i32_0 = arith.constant 0 : i32
    %c0_i32_1 = arith.constant 0 : i32
    return %c0_i32, %c0_i32_0 : i32, i32
  }
  func.func @transform_11(%arg0: i32, %arg1: i32) -> (i32, i32, i32) {
    %c0_i32 = arith.constant 0 : i32
    %c0_i32_0 = arith.constant 0 : i32
    return %arg0, %arg1, %c0_i32 : i32, i32, i32
  }
}

module attributes {stable_mosaic.version = 11 : i64} {
  func.func @fnet_layer_kernel(%arg0: i32, %arg1: i32, %arg2: memref<1x8x32xf32, #tpu.memory_space<vmem>>, %arg3: memref<32x64xbf16, #tpu.memory_space<vmem>>, %arg4: memref<8x16xbf16, #tpu.memory_space<vmem>>, %arg5: memref<32x64xbf16, #tpu.memory_space<vmem>>, %arg6: memref<1x64xf32, #tpu.memory_space<vmem>>, %arg7: memref<64x32xbf16, #tpu.memory_space<vmem>>, %arg8: memref<1x32xf32, #tpu.memory_space<vmem>>, %arg9: memref<1x32xf32, #tpu.memory_space<vmem>>, %arg10: memref<1x32xf32, #tpu.memory_space<vmem>>, %arg11: memref<1x32xf32, #tpu.memory_space<vmem>>, %arg12: memref<1x32xf32, #tpu.memory_space<vmem>>, %arg13: memref<1x8x32xf32, #tpu.memory_space<vmem>>, %arg14: memref<16x32xbf16, #tpu.memory_space<vmem>>) attributes {dimension_semantics = [#tpu.dimension_semantics<parallel>, #tpu.dimension_semantics<arbitrary>], iteration_bounds = array<i64: 2, 1>, scalar_prefetch = 0 : i64, scratch_operands = 1 : i64, tpu.core_type = #tpu.core_type<tc>, window_params = [{transform_indices = @transform_0, window_bounds = array<i64: 1, 8, 32>}, {pipeline_mode = #tpu.pipeline_mode<synchronous>, transform_indices = @transform_1, window_bounds = array<i64: 32, 64>}, {transform_indices = @transform_2, window_bounds = array<i64: 8, 16>}, {pipeline_mode = #tpu.pipeline_mode<synchronous>, transform_indices = @transform_3, window_bounds = array<i64: 32, 64>}, {pipeline_mode = #tpu.pipeline_mode<synchronous>, transform_indices = @transform_4, window_bounds = array<i64: 1, 64>}, {pipeline_mode = #tpu.pipeline_mode<synchronous>, transform_indices = @transform_5, window_bounds = array<i64: 64, 32>}, {pipeline_mode = #tpu.pipeline_mode<synchronous>, transform_indices = @transform_6, window_bounds = array<i64: 1, 32>}, {pipeline_mode = #tpu.pipeline_mode<synchronous>, transform_indices = @transform_7, window_bounds = array<i64: 1, 32>}, {pipeline_mode = #tpu.pipeline_mode<synchronous>, transform_indices = @transform_8, window_bounds = array<i64: 1, 32>}, {pipeline_mode = #tpu.pipeline_mode<synchronous>, transform_indices = @transform_9, window_bounds = array<i64: 1, 32>}, {pipeline_mode = #tpu.pipeline_mode<synchronous>, transform_indices = @transform_10, window_bounds = array<i64: 1, 32>}, {transform_indices = @transform_11, window_bounds = array<i64: 1, 8, 32>}]} {
    %c0_i32 = arith.constant 0 : i32
    %0 = arith.cmpi eq, %arg1, %c0_i32 : i32
    %1 = arith.extui %0 : i1 to i32
    %c0_i32_0 = arith.constant 0 : i32
    %2 = arith.cmpi ne, %1, %c0_i32_0 : i32
    scf.if %2 {
      %c0_41 = arith.constant 0 : index
      %c0_42 = arith.constant 0 : index
      %c0_43 = arith.constant 0 : index
      %89 = vector.load %arg2[%c0_41, %c0_42, %c0_43] : memref<1x8x32xf32, #tpu.memory_space<vmem>>, vector<1x8x32xf32>
      %90 = vector.shape_cast %89 : vector<1x8x32xf32> to vector<8x32xf32>
      %91 = arith.truncf %90 : vector<8x32xf32> to vector<8x32xbf16>
      %c0_44 = arith.constant 0 : index
      %c0_45 = arith.constant 0 : index
      %92 = vector.load %arg3[%c0_44, %c0_45] : memref<32x64xbf16, #tpu.memory_space<vmem>>, vector<32x64xbf16>
      %cst_46 = arith.constant dense<0.000000e+00> : vector<8x64xf32>
      %93 = tpu.matmul %91, %92, %cst_46 {dimension_numbers = #tpu.dot_dimension_numbers<[1], [0], [0], [1], [0, 0, 1, 1], [], []>} : vector<8x32xbf16>, vector<32x64xbf16>, vector<8x64xf32> -> vector<8x64xf32>
      %94 = vector.extract_strided_slice %93 {offsets = [0, 0], sizes = [8, 32], strides = [1, 1]} : vector<8x64xf32> to vector<8x32xf32>
      %95 = arith.truncf %94 : vector<8x32xf32> to vector<8x32xbf16>
      %c0_47 = arith.constant 0 : index
      %c0_48 = arith.constant 0 : index
      %96 = vector.load %arg14[%c0_47, %c0_48] : memref<16x32xbf16, #tpu.memory_space<vmem>>, vector<8x32xbf16>
      tpu.vector_store %arg14[%c0_47, %c0_48], %95 {strides = array<i32>} : memref<16x32xbf16, #tpu.memory_space<vmem>>, vector<8x32xbf16>,
      %97 = vector.extract_strided_slice %93 {offsets = [0, 32], sizes = [8, 32], strides = [1, 1]} : vector<8x64xf32> to vector<8x32xf32>
      %98 = arith.truncf %97 : vector<8x32xf32> to vector<8x32xbf16>
      %c8 = arith.constant 8 : index
      %c0_49 = arith.constant 0 : index
      %99 = vector.load %arg14[%c8, %c0_49] : memref<16x32xbf16, #tpu.memory_space<vmem>>, vector<8x32xbf16>
      tpu.vector_store %arg14[%c8, %c0_49], %98 {strides = array<i32>} : memref<16x32xbf16, #tpu.memory_space<vmem>>, vector<8x32xbf16>,
    } else {
    }
    %c0 = arith.constant 0 : index
    %c0_1 = arith.constant 0 : index
    %3 = vector.load %arg4[%c0, %c0_1] : memref<8x16xbf16, #tpu.memory_space<vmem>>, vector<8x16xbf16>
    %c0_2 = arith.constant 0 : index
    %c0_3 = arith.constant 0 : index
    %4 = vector.load %arg14[%c0_2, %c0_3] : memref<16x32xbf16, #tpu.memory_space<vmem>>, vector<16x32xbf16>
    %cst = arith.constant dense<0.000000e+00> : vector<8x32xf32>
    %5 = tpu.matmul %3, %4, %cst {dimension_numbers = #tpu.dot_dimension_numbers<[1], [0], [0], [1], [0, 0, 1, 1], [], []>} : vector<8x16xbf16>, vector<16x32xbf16>, vector<8x32xf32> -> vector<8x32xf32>
    %c8_i32 = arith.constant 8 : i32
    %6 = arith.muli %arg1, %c8_i32 : i32
    %7 = tpu.assume_multiple %6, 8 : i32
    %c0_4 = arith.constant 0 : index
    %8 = arith.index_cast %7 : i32 to index
    %c0_5 = arith.constant 0 : index
    %9 = vector.load %arg2[%c0_4, %8, %c0_5] : memref<1x8x32xf32, #tpu.memory_space<vmem>>, vector<1x8x32xf32>
    %10 = vector.shape_cast %9 : vector<1x8x32xf32> to vector<8x32xf32>
    %11 = arith.addf %5, %10 : vector<8x32xf32>
    %c0_6 = arith.constant 0 : index
    %c0_7 = arith.constant 0 : index
    %12 = vector.load %arg9[%c0_6, %c0_7] : memref<1x32xf32, #tpu.memory_space<vmem>>, vector<1x32xf32>
    %c0_8 = arith.constant 0 : index
    %c0_9 = arith.constant 0 : index
    %13 = vector.load %arg10[%c0_8, %c0_9] : memref<1x32xf32, #tpu.memory_space<vmem>>, vector<1x32xf32>
    %cst_10 = arith.constant dense<0.000000e+00> : vector<8xf32>
    %14 = vector.multi_reduction <add>, %11, %cst_10 [1] : vector<8x32xf32> to vector<8xf32>
    %15 = vector.shape_cast %14 : vector<8xf32> to vector<8x1xf32>
    %cst_11 = arith.constant 3.200000e+01 : f32
    %16 = vector.broadcast %cst_11 : f32 to vector<8x1xf32>
    %17 = arith.divf %15, %16 : vector<8x1xf32>
    %18 = vector.broadcast %17 : vector<8x1xf32> to vector<8x32xf32>
    %19 = arith.subf %11, %18 : vector<8x32xf32>
    %20 = arith.mulf %19, %19 : vector<8x32xf32>
    %cst_12 = arith.constant dense<0.000000e+00> : vector<8xf32>
    %21 = vector.multi_reduction <add>, %20, %cst_12 [1] : vector<8x32xf32> to vector<8xf32>
    %22 = vector.shape_cast %21 : vector<8xf32> to vector<8x1xf32>
    %cst_13 = arith.constant 3.200000e+01 : f32
    %23 = vector.broadcast %cst_13 : f32 to vector<8x1xf32>
    %24 = arith.divf %22, %23 : vector<8x1xf32>
    %25 = vector.broadcast %17 : vector<8x1xf32> to vector<8x32xf32>
    %26 = arith.subf %11, %25 : vector<8x32xf32>
    %cst_14 = arith.constant 9.99999996E-13 : f32
    %27 = vector.broadcast %cst_14 : f32 to vector<8x1xf32>
    %28 = arith.addf %24, %27 : vector<8x1xf32>
    %29 = math.rsqrt %28 : vector<8x1xf32>
    %30 = vector.broadcast %29 : vector<8x1xf32> to vector<8x32xf32>
    %31 = arith.mulf %26, %30 : vector<8x32xf32>
    %32 = vector.broadcast %12 : vector<1x32xf32> to vector<8x32xf32>
    %33 = arith.mulf %31, %32 : vector<8x32xf32>
    %34 = vector.broadcast %13 : vector<1x32xf32> to vector<8x32xf32>
    %35 = arith.addf %33, %34 : vector<8x32xf32>
    %36 = arith.truncf %35 : vector<8x32xf32> to vector<8x32xbf16>
    %c0_15 = arith.constant 0 : index
    %c0_16 = arith.constant 0 : index
    %37 = vector.load %arg5[%c0_15, %c0_16] : memref<32x64xbf16, #tpu.memory_space<vmem>>, vector<32x64xbf16>
    %cst_17 = arith.constant dense<0.000000e+00> : vector<8x64xf32>
    %38 = tpu.matmul %36, %37, %cst_17 {dimension_numbers = #tpu.dot_dimension_numbers<[1], [0], [0], [1], [0, 0, 1, 1], [], []>} : vector<8x32xbf16>, vector<32x64xbf16>, vector<8x64xf32> -> vector<8x64xf32>
    %c0_18 = arith.constant 0 : index
    %c0_19 = arith.constant 0 : index
    %39 = vector.load %arg6[%c0_18, %c0_19] : memref<1x64xf32, #tpu.memory_space<vmem>>, vector<1x64xf32>
    %40 = vector.broadcast %39 : vector<1x64xf32> to vector<8x64xf32>
    %41 = arith.addf %38, %40 : vector<8x64xf32>
    %42 = arith.mulf %41, %41 : vector<8x64xf32>
    %43 = arith.mulf %41, %42 : vector<8x64xf32>
    %cst_20 = arith.constant 4.471500e-02 : f32
    %44 = vector.broadcast %cst_20 : f32 to vector<8x64xf32>
    %45 = arith.mulf %44, %43 : vector<8x64xf32>
    %46 = arith.addf %41, %45 : vector<8x64xf32>
    %cst_21 = arith.constant 0.797884583 : f32
    %47 = vector.broadcast %cst_21 : f32 to vector<8x64xf32>
    %48 = arith.mulf %47, %46 : vector<8x64xf32>
    %49 = math.tanh %48 : vector<8x64xf32>
    %cst_22 = arith.constant 1.000000e+00 : f32
    %50 = vector.broadcast %cst_22 : f32 to vector<8x64xf32>
    %51 = arith.addf %50, %49 : vector<8x64xf32>
    %cst_23 = arith.constant 5.000000e-01 : f32
    %52 = vector.broadcast %cst_23 : f32 to vector<8x64xf32>
    %53 = arith.mulf %52, %51 : vector<8x64xf32>
    %54 = arith.mulf %41, %53 : vector<8x64xf32>
    %55 = arith.truncf %54 : vector<8x64xf32> to vector<8x64xbf16>
    %c0_24 = arith.constant 0 : index
    %c0_25 = arith.constant 0 : index
    %56 = vector.load %arg7[%c0_24, %c0_25] : memref<64x32xbf16, #tpu.memory_space<vmem>>, vector<64x32xbf16>
    %cst_26 = arith.constant dense<0.000000e+00> : vector<8x32xf32>
    %57 = tpu.matmul %55, %56, %cst_26 {dimension_numbers = #tpu.dot_dimension_numbers<[1], [0], [0], [1], [0, 0, 1, 1], [], []>} : vector<8x64xbf16>, vector<64x32xbf16>, vector<8x32xf32> -> vector<8x32xf32>
    %c0_27 = arith.constant 0 : index
    %c0_28 = arith.constant 0 : index
    %58 = vector.load %arg8[%c0_27, %c0_28] : memref<1x32xf32, #tpu.memory_space<vmem>>, vector<1x32xf32>
    %59 = vector.broadcast %58 : vector<1x32xf32> to vector<8x32xf32>
    %60 = arith.addf %57, %59 : vector<8x32xf32>
    %61 = arith.addf %60, %35 : vector<8x32xf32>
    %c0_29 = arith.constant 0 : index
    %c0_30 = arith.constant 0 : index
    %62 = vector.load %arg11[%c0_29, %c0_30] : memref<1x32xf32, #tpu.memory_space<vmem>>, vector<1x32xf32>
    %c0_31 = arith.constant 0 : index
    %c0_32 = arith.constant 0 : index
    %63 = vector.load %arg12[%c0_31, %c0_32] : memref<1x32xf32, #tpu.memory_space<vmem>>, vector<1x32xf32>
    %cst_33 = arith.constant dense<0.000000e+00> : vector<8xf32>
    %64 = vector.multi_reduction <add>, %61, %cst_33 [1] : vector<8x32xf32> to vector<8xf32>
    %65 = vector.shape_cast %64 : vector<8xf32> to vector<8x1xf32>
    %cst_34 = arith.constant 3.200000e+01 : f32
    %66 = vector.broadcast %cst_34 : f32 to vector<8x1xf32>
    %67 = arith.divf %65, %66 : vector<8x1xf32>
    %68 = vector.broadcast %67 : vector<8x1xf32> to vector<8x32xf32>
    %69 = arith.subf %61, %68 : vector<8x32xf32>
    %70 = arith.mulf %69, %69 : vector<8x32xf32>
    %cst_35 = arith.constant dense<0.000000e+00> : vector<8xf32>
    %71 = vector.multi_reduction <add>, %70, %cst_35 [1] : vector<8x32xf32> to vector<8xf32>
    %72 = vector.shape_cast %71 : vector<8xf32> to vector<8x1xf32>
    %cst_36 = arith.constant 3.200000e+01 : f32
    %73 = vector.broadcast %cst_36 : f32 to vector<8x1xf32>
    %74 = arith.divf %72, %73 : vector<8x1xf32>
    %75 = vector.broadcast %67 : vector<8x1xf32> to vector<8x32xf32>
    %76 = arith.subf %61, %75 : vector<8x32xf32>
    %cst_37 = arith.constant 9.99999996E-13 : f32
    %77 = vector.broadcast %cst_37 : f32 to vector<8x1xf32>
    %78 = arith.addf %74, %77 : vector<8x1xf32>
    %79 = math.rsqrt %78 : vector<8x1xf32>
    %80 = vector.broadcast %79 : vector<8x1xf32> to vector<8x32xf32>
    %81 = arith.mulf %76, %80 : vector<8x32xf32>
    %82 = vector.broadcast %62 : vector<1x32xf32> to vector<8x32xf32>
    %83 = arith.mulf %81, %82 : vector<8x32xf32>
    %84 = vector.broadcast %63 : vector<1x32xf32> to vector<8x32xf32>
    %85 = arith.addf %83, %84 : vector<8x32xf32>
    %c0_38 = arith.constant 0 : index
    %c0_39 = arith.constant 0 : index
    %c0_40 = arith.constant 0 : index
    %86 = vector.load %arg13[%c0_38, %c0_39, %c0_40] : memref<1x8x32xf32, #tpu.memory_space<vmem>>, vector<1x8x32xf32>
    %87 = vector.shape_cast %86 : vector<1x8x32xf32> to vector<8x32xf32>
    %88 = vector.shape_cast %85 : vector<8x32xf32> to vector<1x8x32xf32>
    tpu.vector_store %arg13[%c0_38, %c0_39, %c0_40], %88 {strides = array<i32>} : memref<1x8x32xf32, #tpu.memory_space<vmem>>, vector<1x8x32xf32>,
    return
  }
  func.func @transform_0(%arg0: i32, %arg1: i32) -> (i32, i32, i32) {
    %c0_i32 = arith.constant 0 : i32
    %c0_i32_0 = arith.constant 0 : i32
    %c0_i32_1 = arith.constant 0 : i32
    return %arg0, %c0_i32, %c0_i32_0 : i32, i32, i32
  }
  func.func @transform_1(%arg0: i32, %arg1: i32) -> (i32, i32) {
    %c0_i32 = arith.constant 0 : i32
    %c0_i32_0 = arith.constant 0 : i32
    %c0_i32_1 = arith.constant 0 : i32
    return %c0_i32, %c0_i32_0 : i32, i32
  }
  func.func @transform_2(%arg0: i32, %arg1: i32) -> (i32, i32) {
    %c0_i32 = arith.constant 0 : i32
    %c0_i32_0 = arith.constant 0 : i32
    return %arg1, %c0_i32 : i32, i32
  }
  func.func @transform_3(%arg0: i32, %arg1: i32) -> (i32, i32) {
    %c0_i32 = arith.constant 0 : i32
    %c0_i32_0 = arith.constant 0 : i32
    %c0_i32_1 = arith.constant 0 : i32
    return %c0_i32, %c0_i32_0 : i32, i32
  }
  func.func @transform_4(%arg0: i32, %arg1: i32) -> (i32, i32) {
    %c0_i32 = arith.constant 0 : i32
    %c0_i32_0 = arith.constant 0 : i32
    %c0_i32_1 = arith.constant 0 : i32
    return %c0_i32, %c0_i32_0 : i32, i32
  }
  func.func @transform_5(%arg0: i32, %arg1: i32) -> (i32, i32) {
    %c0_i32 = arith.constant 0 : i32
    %c0_i32_0 = arith.constant 0 : i32
    %c0_i32_1 = arith.constant 0 : i32
    return %c0_i32, %c0_i32_0 : i32, i32
  }
  func.func @transform_6(%arg0: i32, %arg1: i32) -> (i32, i32) {
    %c0_i32 = arith.constant 0 : i32
    %c0_i32_0 = arith.constant 0 : i32
    %c0_i32_1 = arith.constant 0 : i32
    return %c0_i32, %c0_i32_0 : i32, i32
  }
  func.func @transform_7(%arg0: i32, %arg1: i32) -> (i32, i32) {
    %c0_i32 = arith.constant 0 : i32
    %c0_i32_0 = arith.constant 0 : i32
    %c0_i32_1 = arith.constant 0 : i32
    return %c0_i32, %c0_i32_0 : i32, i32
  }
  func.func @transform_8(%arg0: i32, %arg1: i32) -> (i32, i32) {
    %c0_i32 = arith.constant 0 : i32
    %c0_i32_0 = arith.constant 0 : i32
    %c0_i32_1 = arith.constant 0 : i32
    return %c0_i32, %c0_i32_0 : i32, i32
  }
  func.func @transform_9(%arg0: i32, %arg1: i32) -> (i32, i32) {
    %c0_i32 = arith.constant 0 : i32
    %c0_i32_0 = arith.constant 0 : i32
    %c0_i32_1 = arith.constant 0 : i32
    return %c0_i32, %c0_i32_0 : i32, i32
  }
  func.func @transform_10(%arg0: i32, %arg1: i32) -> (i32, i32) {
    %c0_i32 = arith.constant 0 : i32
    %c0_i32_0 = arith.constant 0 : i32
    %c0_i32_1 = arith.constant 0 : i32
    return %c0_i32, %c0_i32_0 : i32, i32
  }
  func.func @transform_11(%arg0: i32, %arg1: i32) -> (i32, i32, i32) {
    %c0_i32 = arith.constant 0 : i32
    %c0_i32_0 = arith.constant 0 : i32
    return %arg0, %arg1, %c0_i32 : i32, i32, i32
  }
}

</mosaic_0001>

<llo_original>
// kernel: tpu_custom_call.1
$region0: #{tpu_custom_call.1}
  #allocation0 [shape = 'u32[]', space=smem, size = 0x4, offset = 0x4, fixed_abs, tag = 'smem constant byte address 0x4 - core index']
  #allocation1 [shape = 'u32[72,128]{1,0:T(1,128)}', space=vmem, size = 0x9000, scoped, tag = 'internal scratch']
  #allocation2 [shape = 'bf16[16,32]{1,0:T(8,128)(2,1)}', space=vmem, size = 0x1000, scoped, tag = 'scratch operand']
  %s0 = inlined_call_operand.vmem [shape: f32[2,8,32], index: 0, kind: input, shape index: {}]
  %s1 = inlined_call_operand.vmem [shape: bf16[32,64], index: 1, kind: input, shape index: {}]
  %s2 = inlined_call_operand.hbm [shape: bf16[8,16], index: 2, kind: input, shape index: {}]
  %s3 = inlined_call_operand.vmem [shape: bf16[32,64], index: 3, kind: input, shape index: {}]
  %s4 = inlined_call_operand.vmem [shape: f32[1,64], index: 4, kind: input, shape index: {}]
  %s5 = inlined_call_operand.vmem [shape: bf16[64,32], index: 5, kind: input, shape index: {}]
  %s6 = inlined_call_operand.vmem [shape: f32[1,32], index: 6, kind: input, shape index: {}]
  %s7 = inlined_call_operand.vmem [shape: f32[1,32], index: 7, kind: input, shape index: {}]
  %s8 = inlined_call_operand.vmem [shape: f32[1,32], index: 8, kind: input, shape index: {}]
  %s9 = inlined_call_operand.vmem [shape: f32[1,32], index: 9, kind: input, shape index: {}]
  %s10 = inlined_call_operand.vmem [shape: f32[1,32], index: 10, kind: input, shape index: {}]
  %s11 = inlined_call_operand.hbm [shape: f32[2,8,32], index: 11, kind: output, shape index: {}]
  %s12 = sld [smem:[#allocation0]]
  $region85: #{tpu_custom_call.1} parent=0
    _
  %s14 = ssub.s32 1, %s12
  %s15 = scalar_select 0, %s14, %s12
  $region1: #{tpu_custom_call.1} parent=0
    #allocation3 [shape = 'u8[2048]{0}', space=vmem, size = 0x800, scoped, tag = 'input window, operand 2, single buffered']
    #allocation4 [shape = 's32[2]{0}', space=sflag, size = 0x8, scoped, tag = 'scoped memory for tpu_custom_call.1']
    #allocation5 [shape = 's32[2]{0}', space=sflag, size = 0x8, scoped, tag = 'scoped memory for tpu_custom_call.1']
    #allocation6 [shape = 'u8[8192]{0}', space=vmem, size = 0x2000, scoped, tag = 'output window, operand 0']
    %16 = vsyncpa [#allocation4], 0
    %17 = vsyncpa [#allocation5], 0
    %s18 = scalar_lea.sflag [#allocation5], 1
    %19 = vsyncpa %s18, 0
    loop: start=0, step=1, limit=4
    $region2: #{tpu_custom_call.1} parent=1 // loop_pre_header
      _
    $region3: #{tpu_custom_call.1} parent=1 // loop_header
      %s21 = sphi 0, %s25
      %p22 = scmp.ge.s32.totalorder %s21, 4
      %s28 = sphi 0, %s40
      %s29 = sphi 0, %s36
      %s30 = sphi 0, %s28
      %s31 = sphi 0, %s29
      %s32 = sphi 0, %s30
      %s33 = sphi 0, %s31
      %s43 = sphi 0, %s45
      %s46 = sphi 0, %s43
      %s47 = sphi 0, %s46
      %s63 = sphi 0, %s47
      %s67 = sphi 0, %s67
      %s69 = sphi 0, %s67
      %s70 = sphi 0, %s69
      %s84 = sphi 0, %s70
      %s90 = sphi 0, %s92
      %s93 = sphi 0, %s90
      %s94 = sphi 0, %s93
      %s110 = sphi 0, %s94
      %s114 = sphi 0, %s114
      %s116 = sphi 0, %s114
      %s117 = sphi 0, %s116
      %s131 = sphi 0, %s117
      %s135 = sphi 0, %s135
      %s137 = sphi 0, %s135
      %s138 = sphi 0, %s137
      %s152 = sphi 0, %s138
      %s156 = sphi 0, %s156
      %s158 = sphi 0, %s156
      %s159 = sphi 0, %s158
      %s173 = sphi 0, %s159
      %s177 = sphi 0, %s177
      %s179 = sphi 0, %s177
      %s180 = sphi 0, %s179
      %s194 = sphi 0, %s180
      %s198 = sphi 0, %s198
      %s200 = sphi 0, %s198
      %s201 = sphi 0, %s200
      %s215 = sphi 0, %s201
      %s219 = sphi 0, %s219
      %s221 = sphi 0, %s219
      %s222 = sphi 0, %s221
      %s236 = sphi 0, %s222
      %s240 = sphi 0, %s240
      %s242 = sphi 0, %s240
      %s243 = sphi 0, %s242
      %s257 = sphi 0, %s243
      %s261 = sphi 0, %s261
      %s263 = sphi 0, %s261
      %s264 = sphi 0, %s263
      %s278 = sphi 0, %s264
      %s286 = sphi 0, %s288
      %s289 = sphi 0, %s286
      %s290 = sphi 0, %s289
      %s306 = sphi 0, %s290
    $region4: #{tpu_custom_call.1} parent=1 // loop_header_branch
      %24 = sbr.rel (%p22) target = $region8
    $region5: #{tpu_custom_call.1} parent=1 // loop_body
      %s26 = ssub.s32 %s21, 1
      %s27 = ssub.s32 %s21, 2
      %s34 = sadd.s32 1, %s29
      %p35 = scmp.ge.s32.totalorder %s34, 1
      %s36 = scalar_select %p35, 0, %s34
      %s37 = sadd.s32 1, %s28
      %s38 = scalar_select %p35, %s37, %s28
      %p39 = scmp.ge.s32.totalorder %s38, 2
      %s40 = scalar_select %p39, 0, %s38
      %s41 = ssub.s32 %s28, %s40
      %p42 = scmp.eq.s32.totalorder %s41, 0
      %s44 = sadd.s32 %s43, 1
      %s45 = scalar_select %p42, %s43, %s44
      %p48 = pneg %p42
      %p49 = scmp.eq.s32.totalorder %s21, 1
      %p50 = por %p48, %p49
      %p51 = scmp.ne.s32.totalorder %s43, %s46
      %p52 = scmp.eq.s32.totalorder %s21, 0
      %p53 = por %p51, %p52
      %p54 = scmp.ne.s32.totalorder %s43, %s46
      %p55 = scmp.eq.s32.totalorder %s26, 1
      %p56 = por %p54, %p55
      %p57 = scmp.ne.s32.totalorder %s46, %s47
      %p58 = scmp.eq.s32.totalorder %s26, 0
      %p59 = por %p57, %p58
      %p60 = scmp.ne.s32.totalorder %s46, %s47
      %p61 = scmp.eq.s32.totalorder %s27, 1
      %p62 = por %p60, %p61
      %p64 = scmp.ne.s32.totalorder %s47, %s63
      %p65 = scmp.eq.s32.totalorder %s27, 0
      %p66 = por %p64, %p65
      %s68 = sadd.s32 %s67, 1
      %p71 = scmp.eq.s32.totalorder %s21, 1
      %p72 = scmp.ne.s32.totalorder %s67, %s69
      %p73 = scmp.eq.s32.totalorder %s21, 0
      %p74 = por %p72, %p73
      %p75 = scmp.ne.s32.totalorder %s67, %s69
      %p76 = scmp.eq.s32.totalorder %s26, 1
      %p77 = por %p75, %p76
      %p78 = scmp.ne.s32.totalorder %s69, %s70
      %p79 = scmp.eq.s32.totalorder %s26, 0
      %p80 = por %p78, %p79
      %p81 = scmp.ne.s32.totalorder %s69, %s70
      %p82 = scmp.eq.s32.totalorder %s27, 1
      %p83 = por %p81, %p82
      %p85 = scmp.ne.s32.totalorder %s70, %s84
      %p86 = scmp.eq.s32.totalorder %s27, 0
      %p87 = por %p85, %p86
      %s88 = ssub.s32 %s29, %s36
      %p89 = scmp.eq.s32.totalorder %s88, 0
      %s91 = sadd.s32 %s90, 1
      %s92 = scalar_select %p89, %s90, %s91
      %p95 = pneg %p89
      %p96 = scmp.eq.s32.totalorder %s21, 1
      %p97 = por %p95, %p96
      %p98 = scmp.ne.s32.totalorder %s90, %s93
      %p99 = scmp.eq.s32.totalorder %s21, 0
      %p100 = por %p98, %p99
      %p101 = scmp.ne.s32.totalorder %s90, %s93
      %p102 = scmp.eq.s32.totalorder %s26, 1
      %p103 = por %p101, %p102
      %p104 = scmp.ne.s32.totalorder %s93, %s94
      %p105 = scmp.eq.s32.totalorder %s26, 0
      %p106 = por %p104, %p105
      %p107 = scmp.ne.s32.totalorder %s93, %s94
      %p108 = scmp.eq.s32.totalorder %s27, 1
      %p109 = por %p107, %p108
      %p111 = scmp.ne.s32.totalorder %s94, %s110
      %p112 = scmp.eq.s32.totalorder %s27, 0
      %p113 = por %p111, %p112
      %s115 = sadd.s32 %s114, 1
      %p118 = scmp.eq.s32.totalorder %s21, 1
      %p119 = scmp.ne.s32.totalorder %s114, %s116
      %p120 = scmp.eq.s32.totalorder %s21, 0
      %p121 = por %p119, %p120
      %p122 = scmp.ne.s32.totalorder %s114, %s116
      %p123 = scmp.eq.s32.totalorder %s26, 1
      %p124 = por %p122, %p123
      %p125 = scmp.ne.s32.totalorder %s116, %s117
      %p126 = scmp.eq.s32.totalorder %s26, 0
      %p127 = por %p125, %p126
      %p128 = scmp.ne.s32.totalorder %s116, %s117
      %p129 = scmp.eq.s32.totalorder %s27, 1
      %p130 = por %p128, %p129
      %p132 = scmp.ne.s32.totalorder %s117, %s131
      %p133 = scmp.eq.s32.totalorder %s27, 0
      %p134 = por %p132, %p133
      %s136 = sadd.s32 %s135, 1
      %p139 = scmp.eq.s32.totalorder %s21, 1
      %p140 = scmp.ne.s32.totalorder %s135, %s137
      %p141 = scmp.eq.s32.totalorder %s21, 0
      %p142 = por %p140, %p141
      %p143 = scmp.ne.s32.totalorder %s135, %s137
      %p144 = scmp.eq.s32.totalorder %s26, 1
      %p145 = por %p143, %p144
      %p146 = scmp.ne.s32.totalorder %s137, %s138
      %p147 = scmp.eq.s32.totalorder %s26, 0
      %p148 = por %p146, %p147
      %p149 = scmp.ne.s32.totalorder %s137, %s138
      %p150 = scmp.eq.s32.totalorder %s27, 1
      %p151 = por %p149, %p150
      %p153 = scmp.ne.s32.totalorder %s138, %s152
      %p154 = scmp.eq.s32.totalorder %s27, 0
      %p155 = por %p153, %p154
      %s157 = sadd.s32 %s156, 1
      %p160 = scmp.eq.s32.totalorder %s21, 1
      %p161 = scmp.ne.s32.totalorder %s156, %s158
      %p162 = scmp.eq.s32.totalorder %s21, 0
      %p163 = por %p161, %p162
      %p164 = scmp.ne.s32.totalorder %s156, %s158
      %p165 = scmp.eq.s32.totalorder %s26, 1
      %p166 = por %p164, %p165
      %p167 = scmp.ne.s32.totalorder %s158, %s159
      %p168 = scmp.eq.s32.totalorder %s26, 0
      %p169 = por %p167, %p168
      %p170 = scmp.ne.s32.totalorder %s158, %s159
      %p171 = scmp.eq.s32.totalorder %s27, 1
      %p172 = por %p170, %p171
      %p174 = scmp.ne.s32.totalorder %s159, %s173
      %p175 = scmp.eq.s32.totalorder %s27, 0
      %p176 = por %p174, %p175
      %s178 = sadd.s32 %s177, 1
      %p181 = scmp.eq.s32.totalorder %s21, 1
      %p182 = scmp.ne.s32.totalorder %s177, %s179
      %p183 = scmp.eq.s32.totalorder %s21, 0
      %p184 = por %p182, %p183
      %p185 = scmp.ne.s32.totalorder %s177, %s179
      %p186 = scmp.eq.s32.totalorder %s26, 1
      %p187 = por %p185, %p186
      %p188 = scmp.ne.s32.totalorder %s179, %s180
      %p189 = scmp.eq.s32.totalorder %s26, 0
      %p190 = por %p188, %p189
      %p191 = scmp.ne.s32.totalorder %s179, %s180
      %p192 = scmp.eq.s32.totalorder %s27, 1
      %p193 = por %p191, %p192
      %p195 = scmp.ne.s32.totalorder %s180, %s194
      %p196 = scmp.eq.s32.totalorder %s27, 0
      %p197 = por %p195, %p196
      %s199 = sadd.s32 %s198, 1
      %p202 = scmp.eq.s32.totalorder %s21, 1
      %p203 = scmp.ne.s32.totalorder %s198, %s200
      %p204 = scmp.eq.s32.totalorder %s21, 0
      %p205 = por %p203, %p204
      %p206 = scmp.ne.s32.totalorder %s198, %s200
      %p207 = scmp.eq.s32.totalorder %s26, 1
      %p208 = por %p206, %p207
      %p209 = scmp.ne.s32.totalorder %s200, %s201
      %p210 = scmp.eq.s32.totalorder %s26, 0
      %p211 = por %p209, %p210
      %p212 = scmp.ne.s32.totalorder %s200, %s201
      %p213 = scmp.eq.s32.totalorder %s27, 1
      %p214 = por %p212, %p213
      %p216 = scmp.ne.s32.totalorder %s201, %s215
      %p217 = scmp.eq.s32.totalorder %s27, 0
      %p218 = por %p216, %p217
      %s220 = sadd.s32 %s219, 1
      %p223 = scmp.eq.s32.totalorder %s21, 1
      %p224 = scmp.ne.s32.totalorder %s219, %s221
      %p225 = scmp.eq.s32.totalorder %s21, 0
      %p226 = por %p224, %p225
      %p227 = scmp.ne.s32.totalorder %s219, %s221
      %p228 = scmp.eq.s32.totalorder %s26, 1
      %p229 = por %p227, %p228
      %p230 = scmp.ne.s32.totalorder %s221, %s222
      %p231 = scmp.eq.s32.totalorder %s26, 0
      %p232 = por %p230, %p231
      %p233 = scmp.ne.s32.totalorder %s221, %s222
      %p234 = scmp.eq.s32.totalorder %s27, 1
      %p235 = por %p233, %p234
      %p237 = scmp.ne.s32.totalorder %s222, %s236
      %p238 = scmp.eq.s32.totalorder %s27, 0
      %p239 = por %p237, %p238
      %s241 = sadd.s32 %s240, 1
      %p244 = scmp.eq.s32.totalorder %s21, 1
      %p245 = scmp.ne.s32.totalorder %s240, %s242
      %p246 = scmp.eq.s32.totalorder %s21, 0
      %p247 = por %p245, %p246
      %p248 = scmp.ne.s32.totalorder %s240, %s242
      %p249 = scmp.eq.s32.totalorder %s26, 1
      %p250 = por %p248, %p249
      %p251 = scmp.ne.s32.totalorder %s242, %s243
      %p252 = scmp.eq.s32.totalorder %s26, 0
      %p253 = por %p251, %p252
      %p254 = scmp.ne.s32.totalorder %s242, %s243
      %p255 = scmp.eq.s32.totalorder %s27, 1
      %p256 = por %p254, %p255
      %p258 = scmp.ne.s32.totalorder %s243, %s257
      %p259 = scmp.eq.s32.totalorder %s27, 0
      %p260 = por %p258, %p259
      %s262 = sadd.s32 %s261, 1
      %p265 = scmp.eq.s32.totalorder %s21, 1
      %p266 = scmp.ne.s32.totalorder %s261, %s263
      %p267 = scmp.eq.s32.totalorder %s21, 0
      %p268 = por %p266, %p267
      %p269 = scmp.ne.s32.totalorder %s261, %s263
      %p270 = scmp.eq.s32.totalorder %s26, 1
      %p271 = por %p269, %p270
      %p272 = scmp.ne.s32.totalorder %s263, %s264
      %p273 = scmp.eq.s32.totalorder %s26, 0
      %p274 = por %p272, %p273
      %p275 = scmp.ne.s32.totalorder %s263, %s264
      %p276 = scmp.eq.s32.totalorder %s27, 1
      %p277 = por %p275, %p276
      %p279 = scmp.ne.s32.totalorder %s264, %s278
      %p280 = scmp.eq.s32.totalorder %s27, 0
      %p281 = por %p279, %p280
      %s282 = ssub.s32 %s28, %s40
      %s283 = ssub.s32 %s29, %s36
      %s284 = sor.u32 %s282, %s283
      %p285 = scmp.eq.s32.totalorder %s284, 0
      %s287 = sadd.s32 %s286, 1
      %s288 = scalar_select %p285, %s286, %s287
      %p291 = pneg %p285
      %p292 = scmp.eq.s32.totalorder %s21, 1
      %p293 = por %p291, %p292
      %p294 = scmp.ne.s32.totalorder %s286, %s289
      %p295 = scmp.eq.s32.totalorder %s21, 0
      %p296 = por %p294, %p295
      %p297 = scmp.ne.s32.totalorder %s286, %s289
      %p298 = scmp.eq.s32.totalorder %s26, 1
      %p299 = por %p297, %p298
      %p300 = scmp.ne.s32.totalorder %s289, %s290
      %p301 = scmp.eq.s32.totalorder %s26, 0
      %p302 = por %p300, %p301
      %p303 = scmp.ne.s32.totalorder %s289, %s290
      %p304 = scmp.eq.s32.totalorder %s27, 1
      %p305 = por %p303, %p304
      %p307 = scmp.ne.s32.totalorder %s290, %s306
      %p308 = scmp.eq.s32.totalorder %s27, 0
      %p309 = por %p307, %p308
      %p310 = scmp.le.s32.totalorder 1, %s21
      %p311 = scmp.lt.s32.totalorder %s21, 3
      %p312 = pnand %p310, %p311
      %p313 = pneg %p312
      // Predicated region
      $region9: #{tpu_custom_call.1} parent=5 // pred_check
        _
      $region10: #{tpu_custom_call.1} parent=5 // pred_check_branch
        %315 = sbr.rel (%p312) target = $region12
      $region11: #{tpu_custom_call.1} parent=5 // pred_region
        %s316 = ssub.s32 %s21, 1
        // Predicated region
        $region13: #{tpu_custom_call.1} parent=11 // pred_check
          %p317 = pneg %p59
        $region14: #{tpu_custom_call.1} parent=11 // pred_check_branch
          %319 = sbr.rel (%p317) target = $region16
        $region15: #{tpu_custom_call.1} parent=11 // pred_region
          %p320 = scmp.lt.s32.totalorder %s30, 1
          %s321 = scalar_select %p320, %s30, 1
          %s322 = smul.addr %s321, 8
          %s323 = scalar_lea.vmem %s0, %s322
        $region16: #{tpu_custom_call.1} parent=11 // pred_fallthru
          _
        // Predicated region
        $region17: #{tpu_custom_call.1} parent=11 // pred_check
          %p324 = pneg %p80
        $region18: #{tpu_custom_call.1} parent=11 // pred_check_branch
          %326 = sbr.rel (%p324) target = $region20
        $region19: #{tpu_custom_call.1} parent=11 // pred_region
          _
        $region20: #{tpu_custom_call.1} parent=11 // pred_fallthru
          _
        // Predicated region
        $region21: #{tpu_custom_call.1} parent=11 // pred_check
          %p327 = pneg %p106
        $region22: #{tpu_custom_call.1} parent=11 // pred_check_branch
          %329 = sbr.rel (%p327) target = $region24
        $region23: #{tpu_custom_call.1} parent=11 // pred_region
          %331 = vsyncadd [#allocation4], 0
          %s332 = smul.addr %s31, 4
          %s333 = scalar_lea.hbm %s2, %s332
          %s335 = sshll.u32 %s333, 4
          %s336 = int_to_ptr.hbm [resolvable:$true] %s335
          %s337 = sshll.u32 [#allocation3], 4
          %s338 = int_to_ptr.vmem [resolvable:$true] %s337
          %340 = dma.hbm_to_vmem [thread:$0]  %s336, 64, %s338, [#allocation4]
        $region24: #{tpu_custom_call.1} parent=11 // pred_fallthru
          _
        // Predicated region
        $region25: #{tpu_custom_call.1} parent=11 // pred_check
          %p341 = pneg %p127
        $region26: #{tpu_custom_call.1} parent=11 // pred_check_branch
          %343 = sbr.rel (%p341) target = $region28
        $region27: #{tpu_custom_call.1} parent=11 // pred_region
          _
        $region28: #{tpu_custom_call.1} parent=11 // pred_fallthru
          _
        // Predicated region
        $region29: #{tpu_custom_call.1} parent=11 // pred_check
          %p344 = pneg %p148
        $region30: #{tpu_custom_call.1} parent=11 // pred_check_branch
          %346 = sbr.rel (%p344) target = $region32
        $region31: #{tpu_custom_call.1} parent=11 // pred_region
          _
        $region32: #{tpu_custom_call.1} parent=11 // pred_fallthru
          _
        // Predicated region
        $region33: #{tpu_custom_call.1} parent=11 // pred_check
          %p347 = pneg %p169
        $region34: #{tpu_custom_call.1} parent=11 // pred_check_branch
          %349 = sbr.rel (%p347) target = $region36
        $region35: #{tpu_custom_call.1} parent=11 // pred_region
          _
        $region36: #{tpu_custom_call.1} parent=11 // pred_fallthru
          _
        // Predicated region
        $region37: #{tpu_custom_call.1} parent=11 // pred_check
          %p350 = pneg %p190
        $region38: #{tpu_custom_call.1} parent=11 // pred_check_branch
          %352 = sbr.rel (%p350) target = $region40
        $region39: #{tpu_custom_call.1} parent=11 // pred_region
          _
        $region40: #{tpu_custom_call.1} parent=11 // pred_fallthru
          _
        // Predicated region
        $region41: #{tpu_custom_call.1} parent=11 // pred_check
          %p353 = pneg %p211
        $region42: #{tpu_custom_call.1} parent=11 // pred_check_branch
          %355 = sbr.rel (%p353) target = $region44
        $region43: #{tpu_custom_call.1} parent=11 // pred_region
          _
        $region44: #{tpu_custom_call.1} parent=11 // pred_fallthru
          _
        // Predicated region
        $region45: #{tpu_custom_call.1} parent=11 // pred_check
          %p356 = pneg %p232
        $region46: #{tpu_custom_call.1} parent=11 // pred_check_branch
          %358 = sbr.rel (%p356) target = $region48
        $region47: #{tpu_custom_call.1} parent=11 // pred_region
          _
        $region48: #{tpu_custom_call.1} parent=11 // pred_fallthru
          _
        // Predicated region
        $region49: #{tpu_custom_call.1} parent=11 // pred_check
          %p359 = pneg %p253
        $region50: #{tpu_custom_call.1} parent=11 // pred_check_branch
          %361 = sbr.rel (%p359) target = $region52
        $region51: #{tpu_custom_call.1} parent=11 // pred_region
          _
        $region52: #{tpu_custom_call.1} parent=11 // pred_fallthru
          _
        // Predicated region
        $region53: #{tpu_custom_call.1} parent=11 // pred_check
          %p362 = pneg %p274
        $region54: #{tpu_custom_call.1} parent=11 // pred_check_branch
          %364 = sbr.rel (%p362) target = $region56
        $region55: #{tpu_custom_call.1} parent=11 // pred_region
          _
        $region56: #{tpu_custom_call.1} parent=11 // pred_fallthru
          _
      $region12: #{tpu_custom_call.1} parent=5 // pred_fallthru
        _
      %p365 = scmp.lt.s32.totalorder %s21, 2
      // Predicated region
      $region57: #{tpu_custom_call.1} parent=5 // pred_check
        %p366 = pneg %p365
      $region58: #{tpu_custom_call.1} parent=5 // pred_check_branch
        %368 = sbr.rel (%p366) target = $region60
      $region59: #{tpu_custom_call.1} parent=5 // pred_region
        _
      $region60: #{tpu_custom_call.1} parent=5 // pred_fallthru
        _
      %p369 = scmp.le.s32.totalorder 1, %s21
      %p370 = scmp.lt.s32.totalorder %s21, 3
      %p371 = pnand %p369, %p370
      %p372 = pneg %p371
      // Predicated region
      $region61: #{tpu_custom_call.1} parent=5 // pred_check
        _
      $region62: #{tpu_custom_call.1} parent=5 // pred_check_branch
        %374 = sbr.rel (%p371) target = $region64
      $region63: #{tpu_custom_call.1} parent=5 // pred_region
        %s375 = ssub.s32 %s21, 1
        // Predicated region
        $region65: #{tpu_custom_call.1} parent=63 // pred_check
          %p376 = pneg %p106
        $region66: #{tpu_custom_call.1} parent=63 // pred_check_branch
          %378 = sbr.rel (%p376) target = $region68
        $region67: #{tpu_custom_call.1} parent=63 // pred_region
          %380 = dma.done [#allocation4], 64
        $region68: #{tpu_custom_call.1} parent=63 // pred_fallthru
          _
        %p381 = scmp.lt.s32.totalorder %s30, 1
        %s382 = scalar_select %p381, %s30, 1
        %s383 = smul.addr %s382, 8
        %s384 = scalar_lea.vmem %s0, %s383
        %p385 = pneg %p59
        %p386 = pneg %p56
        %p387 = pneg %p80
        %p388 = pneg %p77
        %p389 = pneg %p106
        %p390 = pneg %p103
        %p391 = pneg %p127
        %p392 = pneg %p124
        %p393 = pneg %p148
        %p394 = pneg %p145
        %p395 = pneg %p169
        %p396 = pneg %p166
        %p397 = pneg %p190
        %p398 = pneg %p187
        %p399 = pneg %p211
        %p400 = pneg %p208
        %p401 = pneg %p232
        %p402 = pneg %p229
        %p403 = pneg %p253
        %p404 = pneg %p250
        %p405 = pneg %p274
        %p406 = pneg %p271
        %p407 = pneg %p302
        %p408 = pneg %p299
        %s409 = sand.u32 %s289, 1
        %s410 = scalar_lea.sflag [#allocation5], %s409
        %s411 = sand.u32 %s289, 1
        %s412 = smul.addr %s411, 8
        %s413 = scalar_lea.vmem [#allocation6], %s412
        %p414 = scmp.lt.s32.totalorder %s30, 1
        %s415 = scalar_select %p414, %s30, 1
        %s416 = smul.addr %s415, 8
        %s417 = scalar_lea.vmem %s0, %s416
        %p419 = scmp.eq.s32.totalorder %s31, 0
        // Predicated region
        $region69: #{tpu_custom_call.1} parent=63 // pred_check
          %p420 = pneg %p419
        $region70: #{tpu_custom_call.1} parent=63 // pred_check_branch
          %422 = sbr.rel (%p420) target = $region72
        $region71: #{tpu_custom_call.1} parent=63 // pred_region
          %v423 = vld [vmem:[%s417] sm:$0xff]
          %v424 = vpack.c.bf16 %v423, %v423
          %v425 = vld [vmem:[%s1] sm:$0xf]
          %v426 = vld [vmem:[%s1 + $0x4] sm:$0xf]
          %v427 = vld [vmem:[%s1 + $0x8] sm:$0xf]
          %v428 = vld [vmem:[%s1 + $0xc] sm:$0xf]
          %v433 = vunpack.c.l.b16 %v425
          %v434 = vunpack.c.l.b16 %v426
          %v435 = vunpack.c.l.b16 %v427
          %v436 = vunpack.c.l.b16 %v428
          %v437 = vpack.c.b16 %v434, %v433
          %v438 = vpack.c.b16 %v436, %v435
          %vm441 = vcmask 261120
          %v443 = vsel %vm441, %v424, 0
          %445 = vmatpush.bf16.msra.mxu0 0
          %446 = vmatpush.bf16.msra.mxu0 0
          %447 = vmatpush.bf16.msra.mxu0 0
          %448 = vmatpush.bf16.msra.mxu0 0
          %449 = vmatpush.bf16.msra.mxu0 0
          %450 = vmatpush.bf16.msra.mxu0 0
          %451 = vmatpush.bf16.msra.mxu0 %v438
          %452 = vmatpush.bf16.msra.mxu0 %v437
          %453 = vmatmul.bf16.gmra.mxu0 %v443
          %v454 = vpop.f32.mrf.mxu0
          %v455 = vadd.f32 0.0, %v454
          %v456 = vpop.f32.mrf.mxu0
          %457 = vdwg.mxu0
          %v458 = vpack.c.bf16 %v455, %v455
          %vm459 = vcmask 257024
          %460 = vst.msk [vmem:[#allocation2] sm:$0xf] %vm459, %v458
          %462 = vrot.lane.b32.xlu0 %v458, 96
          %v463 = vpop.permute.xlu0 %462
          %465 = vst.msk [vmem:[#allocation2 + $0x4] sm:$0xf] %vm459, %v463
        $region72: #{tpu_custom_call.1} parent=63 // pred_fallthru
          _
        %v466 = vld [vmem:[#allocation3] sm:$0xf]
        %v467 = vld [vmem:[#allocation2] sm:$0xf]
        %v468 = vld [vmem:[#allocation2 + $0x4] sm:$0xf]
        %s469 = smul.u32 %s31, 8
        %s470 = scalar_lea.vmem %s417, %s469
        %v471 = vld [vmem:[%s470] sm:$0xff]
        %v474 = vunpack.c.l.b16 %v467
        %v475 = vunpack.c.l.b16 %v468
        %v476 = vpack.c.b16 %v475, %v474
        %vm478 = vcmask 130048
        %v480 = vsel %vm478, %v466, 0
        %482 = vmatpush.bf16.msra.mxu0 0
        %483 = vmatpush.bf16.msra.mxu0 0
        %484 = vmatpush.bf16.msra.mxu0 0
        %485 = vmatpush.bf16.msra.mxu0 0
        %486 = vmatpush.bf16.msra.mxu0 0
        %487 = vmatpush.bf16.msra.mxu0 0
        %488 = vmatpush.bf16.msra.mxu0 0
        %489 = vmatpush.bf16.msra.mxu0 %v476
        %490 = vmatmul.bf16.gmra.mxu0 %v480
        %v491 = vpop.f32.mrf.mxu0
        %v492 = vadd.f32 %v471, %v491
        %v493 = vpop.f32.mrf.mxu0
        %494 = vdwg.mxu0
        %v495 = vld [vmem:[%s7] sm:$0x1]
        %v496 = vld [vmem:[%s8] sm:$0x1]
        %vm497 = vcmask 261120
        %v498 = vsel %vm497, %v492, 0.0
        %499 = vadd.xlane.f32.xlu0 %v498
        %v500 = vpop.xlane.xlu0 %499
        %v501 = vrcp.pop 32.0
        %v502 = vmul.f32 32.0, %v501
        %v503 = vsub.f32 1.0, %v502
        %v504 = vmul.f32 %v501, %v503
        %v505 = vadd.f32 %v501, %v504
        %vm506 = vweird.f32 %v501
        %v507 = vsel %vm506, %v501, %v505
        %v508 = vmul.f32 %v500, %v507
        %v509 = vsub.f32 %v492, %v508
        %v510 = vmul.f32 %v509, %v509
        %v511 = vsel %vm497, %v510, 0.0
        %512 = vadd.xlane.f32.xlu0 %v511
        %v513 = vpop.xlane.xlu0 %512
        %v514 = vmul.f32 %v513, %v507
        %v515 = vadd.f32 %v514, 1e-12
        %v516 = vrsqrt.pop %v515
        %v517 = vmul.f32 %v516, %v515
        %v518 = vmul.f32 %v517, %v516
        %v519 = vmul.f32 0.5, %v518
        %v520 = vsub.f32 1.5, %v519
        %v521 = vmul.f32 %v516, %v520
        %vm522 = vweird.f32 %v515
        %vm523 = vweird.f32 %v516
        %vm524 = vmor %vm522, %vm523
        %v525 = vsel %vm524, %v516, %v521
        %v526 = vmul.f32 %v509, %v525
        %v528 = vperm.slane %v495, 0
        %v530 = vmul.f32 %v526, %v528
        %v532 = vperm.slane %v496, 0
        %v534 = vadd.f32 %v530, %v532
        %v535 = vpack.c.bf16 %v534, %v534
        %v536 = vld [vmem:[%s3] sm:$0xf]
        %v537 = vld [vmem:[%s3 + $0x4] sm:$0xf]
        %v538 = vld [vmem:[%s3 + $0x8] sm:$0xf]
        %v539 = vld [vmem:[%s3 + $0xc] sm:$0xf]
        %v540 = vld [vmem:[%s4] sm:$0x1]
        %v542 = vperm.slane %v540, 0
        %v548 = vunpack.c.l.b16 %v536
        %v549 = vunpack.c.l.b16 %v537
        %v550 = vunpack.c.l.b16 %v538
        %v551 = vunpack.c.l.b16 %v539
        %v552 = vpack.c.b16 %v549, %v548
        %v553 = vpack.c.b16 %v551, %v550
        %v557 = vsel %vm497, %v535, 0
        %559 = vmatpush.bf16.msra.mxu0 0
        %560 = vmatpush.bf16.msra.mxu0 0
        %561 = vmatpush.bf16.msra.mxu0 0
        %562 = vmatpush.bf16.msra.mxu0 0
        %563 = vmatpush.bf16.msra.mxu0 0
        %564 = vmatpush.bf16.msra.mxu0 0
        %565 = vmatpush.bf16.msra.mxu0 %v553
        %566 = vmatpush.bf16.msra.mxu0 %v552
        %567 = vmatmul.bf16.gmra.mxu0 %v557
        %v568 = vpop.f32.mrf.mxu0
        %v569 = vadd.f32 %v542, %v568
        %v570 = vpop.f32.mrf.mxu0
        %571 = vdwg.mxu0
        %v572 = vmul.f32 %v569, %v569
        %v573 = vmul.f32 %v569, %v572
        %v574 = vmul.f32 %v573, 0.044715
        %v575 = vadd.f32 %v569, %v574
        %v576 = vmul.f32 %v575, 0.7978846
        %v577 = vtanh.pop %v576
        %v578 = vadd.f32 %v577, 1.0
        %v579 = vmul.f32 %v578, 0.5
        %v580 = vmul.f32 %v569, %v579
        %v581 = vpack.c.bf16 %v580, %v580
        %v582 = vld [vmem:[%s5] sm:$0xf]
        %v583 = vld [vmem:[%s5 + $0x4] sm:$0xf]
        %v584 = vld [vmem:[%s5 + $0x8] sm:$0xf]
        %v585 = vld [vmem:[%s5 + $0xc] sm:$0xf]
        %v586 = vld [vmem:[%s5 + $0x10] sm:$0xf]
        %v587 = vld [vmem:[%s5 + $0x14] sm:$0xf]
        %v588 = vld [vmem:[%s5 + $0x18] sm:$0xf]
        %v589 = vld [vmem:[%s5 + $0x1c] sm:$0xf]
        %v590 = vld [vmem:[%s6] sm:$0x1]
        %v592 = vperm.slane %v590, 0
        %v602 = vunpack.c.l.b16 %v582
        %v603 = vunpack.c.l.b16 %v583
        %v604 = vunpack.c.l.b16 %v584
        %v605 = vunpack.c.l.b16 %v585
        %v606 = vunpack.c.l.b16 %v586
        %v607 = vunpack.c.l.b16 %v587
        %v608 = vunpack.c.l.b16 %v588
        %v609 = vunpack.c.l.b16 %v589
        %v610 = vpack.c.b16 %v603, %v602
        %v611 = vpack.c.b16 %v605, %v604
        %v612 = vpack.c.b16 %v607, %v606
        %v613 = vpack.c.b16 %v609, %v608
        %vm618 = vcmask 523264
        %v620 = vsel %vm618, %v581, 0
        %622 = vmatpush.bf16.msra.mxu0 0
        %623 = vmatpush.bf16.msra.mxu0 0
        %624 = vmatpush.bf16.msra.mxu0 0
        %625 = vmatpush.bf16.msra.mxu0 0
        %626 = vmatpush.bf16.msra.mxu0 %v613
        %627 = vmatpush.bf16.msra.mxu0 %v612
        %628 = vmatpush.bf16.msra.mxu0 %v611
        %629 = vmatpush.bf16.msra.mxu0 %v610
        %630 = vmatmul.bf16.gmra.mxu0 %v620
        %v631 = vpop.f32.mrf.mxu0
        %v632 = vadd.f32 %v592, %v631
        %v633 = vpop.f32.mrf.mxu0
        %634 = vdwg.mxu0
        %v635 = vadd.f32 %v632, %v534
        %v636 = vld [vmem:[%s9] sm:$0x1]
        %v637 = vld [vmem:[%s10] sm:$0x1]
        %v638 = vsel %vm497, %v635, 0.0
        %639 = vadd.xlane.f32.xlu0 %v638
        %v640 = vpop.xlane.xlu0 %639
        %v641 = vmul.f32 %v640, %v507
        %v642 = vsub.f32 %v635, %v641
        %v643 = vmul.f32 %v642, %v642
        %v644 = vsel %vm497, %v643, 0.0
        %645 = vadd.xlane.f32.xlu0 %v644
        %v646 = vpop.xlane.xlu0 %645
        %v647 = vmul.f32 %v646, %v507
        %v648 = vadd.f32 %v647, 1e-12
        %v649 = vrsqrt.pop %v648
        %v650 = vmul.f32 %v649, %v648
        %v651 = vmul.f32 %v650, %v649
        %v652 = vmul.f32 0.5, %v651
        %v653 = vsub.f32 1.5, %v652
        %v654 = vmul.f32 %v649, %v653
        %vm655 = vweird.f32 %v648
        %vm656 = vweird.f32 %v649
        %vm657 = vmor %vm655, %vm656
        %v658 = vsel %vm657, %v649, %v654
        %v659 = vmul.f32 %v642, %v658
        %v661 = vperm.slane %v636, 0
        %v663 = vmul.f32 %v659, %v661
        %v665 = vperm.slane %v637, 0
        %v667 = vadd.f32 %v663, %v665
        %668 = vst.msk [vmem:[%s413] sm:$0xff] %vm497, %v667
        %s669 = sand.u32 %s289, 1
        %s670 = scalar_lea.sflag [#allocation5], %s669
        %s671 = sand.u32 %s289, 1
        %s672 = smul.addr %s671, 8
        %s673 = scalar_lea.vmem [#allocation6], %s672
        // Predicated region
        $region73: #{tpu_custom_call.1} parent=63 // pred_check
          %p674 = pneg %p299
        $region74: #{tpu_custom_call.1} parent=63 // pred_check_branch
          %676 = sbr.rel (%p674) target = $region76
        $region75: #{tpu_custom_call.1} parent=63 // pred_region
          %678 = vsyncadd %s670, 0
          %s679 = sadd.s32 %s31, %s30
          %s680 = smul.addr %s679, 8
          %s681 = scalar_lea.hbm %s11, %s680
          %s683 = sshll.u32 %s673, 4
          %s684 = int_to_ptr.vmem [resolvable:$true] %s683
          %s685 = sshll.u32 %s681, 4
          %s686 = int_to_ptr.hbm [resolvable:$true] %s685
          %688 = dma.vmem_to_hbm [thread:$0]  %s684, 128, %s686, %s670
        $region76: #{tpu_custom_call.1} parent=63 // pred_fallthru
          _
      $region64: #{tpu_custom_call.1} parent=5 // pred_fallthru
        _
      %p689 = scmp.le.s32.totalorder 2, %s21
      // Predicated region
      $region77: #{tpu_custom_call.1} parent=5 // pred_check
        %p690 = pneg %p689
      $region78: #{tpu_custom_call.1} parent=5 // pred_check_branch
        %692 = sbr.rel (%p690) target = $region80
      $region79: #{tpu_custom_call.1} parent=5 // pred_region
        %s693 = ssub.s32 %s21, 2
        // Predicated region
        $region81: #{tpu_custom_call.1} parent=79 // pred_check
          %p694 = pneg %p305
        $region82: #{tpu_custom_call.1} parent=79 // pred_check_branch
          %696 = sbr.rel (%p694) target = $region84
        $region83: #{tpu_custom_call.1} parent=79 // pred_region
          %s697 = sand.u32 %s290, 1
          %s698 = scalar_lea.sflag [#allocation5], %s697
          %s699 = sand.u32 %s290, 1
          %s700 = smul.addr %s699, 8
          %s701 = scalar_lea.vmem [#allocation6], %s700
          %703 = dma.done %s698, 128
        $region84: #{tpu_custom_call.1} parent=79 // pred_fallthru
          _
      $region80: #{tpu_custom_call.1} parent=5 // pred_fallthru
        _
    $region6: #{tpu_custom_call.1} parent=1 // loop_footer
      %s25 = sadd.s32 1, %s21
    $region7: #{tpu_custom_call.1} parent=1 // loop_footer_branch
      %20 = sbr.rel target = $region3
    $region8: #{tpu_custom_call.1} parent=1 // loop_exit
      _
    %704 = vsyncpa [#allocation4], 1
    %s705 = scalar_lea.sflag [#allocation4], 1
    %706 = vsyncpa %s705, 1
    %707 = vsyncpa [#allocation5], 1
    %s708 = scalar_lea.sflag [#allocation5], 1
    %709 = vsyncpa %s708, 1

// kernel: tpu_custom_call.1
$region0: #{tpu_custom_call.1}
  #allocation0 [shape = 'u32[]', space=smem, size = 0x4, offset = 0x4, fixed_abs, tag = 'smem constant byte address 0x4 - core index']
  #allocation1 [shape = 'u32[72,128]{1,0:T(1,128)}', space=vmem, size = 0x9000, scoped, tag = 'internal scratch']
  #allocation2 [shape = 'bf16[16,32]{1,0:T(8,128)(2,1)}', space=vmem, size = 0x1000, scoped, tag = 'scratch operand']
  %s0 = inlined_call_operand.vmem [shape: f32[2,8,32], index: 0, kind: input, shape index: {}]
  %s1 = inlined_call_operand.vmem [shape: bf16[32,64], index: 1, kind: input, shape index: {}]
  %s2 = inlined_call_operand.hbm [shape: bf16[8,16], index: 2, kind: input, shape index: {}]
  %s3 = inlined_call_operand.vmem [shape: bf16[32,64], index: 3, kind: input, shape index: {}]
  %s4 = inlined_call_operand.vmem [shape: f32[1,64], index: 4, kind: input, shape index: {}]
  %s5 = inlined_call_operand.vmem [shape: bf16[64,32], index: 5, kind: input, shape index: {}]
  %s6 = inlined_call_operand.vmem [shape: f32[1,32], index: 6, kind: input, shape index: {}]
  %s7 = inlined_call_operand.vmem [shape: f32[1,32], index: 7, kind: input, shape index: {}]
  %s8 = inlined_call_operand.vmem [shape: f32[1,32], index: 8, kind: input, shape index: {}]
  %s9 = inlined_call_operand.vmem [shape: f32[1,32], index: 9, kind: input, shape index: {}]
  %s10 = inlined_call_operand.vmem [shape: f32[1,32], index: 10, kind: input, shape index: {}]
  %s11 = inlined_call_operand.hbm [shape: f32[2,8,32], index: 11, kind: output, shape index: {}]
  %s12 = sld [smem:[#allocation0]]
  $region85: #{tpu_custom_call.1} parent=0
    _
  %s14 = ssub.s32 1, %s12
  %s15 = scalar_select 0, %s14, %s12
  $region1: #{tpu_custom_call.1} parent=0
    #allocation3 [shape = 'u8[2048]{0}', space=vmem, size = 0x800, scoped, tag = 'input window, operand 2, single buffered']
    #allocation4 [shape = 's32[2]{0}', space=sflag, size = 0x8, scoped, tag = 'scoped memory for tpu_custom_call.1']
    #allocation5 [shape = 's32[2]{0}', space=sflag, size = 0x8, scoped, tag = 'scoped memory for tpu_custom_call.1']
    #allocation6 [shape = 'u8[8192]{0}', space=vmem, size = 0x2000, scoped, tag = 'output window, operand 0']
    %16 = vsyncpa [#allocation4], 0
    %17 = vsyncpa [#allocation5], 0
    %s18 = scalar_lea.sflag [#allocation5], 1
    %19 = vsyncpa %s18, 0
    loop: start=0, step=1, limit=4
    $region2: #{tpu_custom_call.1} parent=1 // loop_pre_header
      _
    $region3: #{tpu_custom_call.1} parent=1 // loop_header
      %s21 = sphi 0, %s25
      %p22 = scmp.ge.s32.totalorder %s21, 4
      %s28 = sphi 0, %s40
      %s29 = sphi 0, %s36
      %s30 = sphi 0, %s28
      %s31 = sphi 0, %s29
      %s32 = sphi 0, %s30
      %s33 = sphi 0, %s31
      %s43 = sphi 0, %s45
      %s46 = sphi 0, %s43
      %s47 = sphi 0, %s46
      %s63 = sphi 0, %s47
      %s67 = sphi 0, %s67
      %s69 = sphi 0, %s67
      %s70 = sphi 0, %s69
      %s84 = sphi 0, %s70
      %s90 = sphi 0, %s92
      %s93 = sphi 0, %s90
      %s94 = sphi 0, %s93
      %s110 = sphi 0, %s94
      %s114 = sphi 0, %s114
      %s116 = sphi 0, %s114
      %s117 = sphi 0, %s116
      %s131 = sphi 0, %s117
      %s135 = sphi 0, %s135
      %s137 = sphi 0, %s135
      %s138 = sphi 0, %s137
      %s152 = sphi 0, %s138
      %s156 = sphi 0, %s156
      %s158 = sphi 0, %s156
      %s159 = sphi 0, %s158
      %s173 = sphi 0, %s159
      %s177 = sphi 0, %s177
      %s179 = sphi 0, %s177
      %s180 = sphi 0, %s179
      %s194 = sphi 0, %s180
      %s198 = sphi 0, %s198
      %s200 = sphi 0, %s198
      %s201 = sphi 0, %s200
      %s215 = sphi 0, %s201
      %s219 = sphi 0, %s219
      %s221 = sphi 0, %s219
      %s222 = sphi 0, %s221
      %s236 = sphi 0, %s222
      %s240 = sphi 0, %s240
      %s242 = sphi 0, %s240
      %s243 = sphi 0, %s242
      %s257 = sphi 0, %s243
      %s261 = sphi 0, %s261
      %s263 = sphi 0, %s261
      %s264 = sphi 0, %s263
      %s278 = sphi 0, %s264
      %s286 = sphi 0, %s288
      %s289 = sphi 0, %s286
      %s290 = sphi 0, %s289
      %s306 = sphi 0, %s290
    $region4: #{tpu_custom_call.1} parent=1 // loop_header_branch
      %24 = sbr.rel (%p22) target = $region8
    $region5: #{tpu_custom_call.1} parent=1 // loop_body
      %s26 = ssub.s32 %s21, 1
      %s27 = ssub.s32 %s21, 2
      %s34 = sadd.s32 1, %s29
      %p35 = scmp.ge.s32.totalorder %s34, 1
      %s36 = scalar_select %p35, 0, %s34
      %s37 = sadd.s32 1, %s28
      %s38 = scalar_select %p35, %s37, %s28
      %p39 = scmp.ge.s32.totalorder %s38, 2
      %s40 = scalar_select %p39, 0, %s38
      %s41 = ssub.s32 %s28, %s40
      %p42 = scmp.eq.s32.totalorder %s41, 0
      %s44 = sadd.s32 %s43, 1
      %s45 = scalar_select %p42, %s43, %s44
      %p48 = pneg %p42
      %p49 = scmp.eq.s32.totalorder %s21, 1
      %p50 = por %p48, %p49
      %p51 = scmp.ne.s32.totalorder %s43, %s46
      %p52 = scmp.eq.s32.totalorder %s21, 0
      %p53 = por %p51, %p52
      %p54 = scmp.ne.s32.totalorder %s43, %s46
      %p55 = scmp.eq.s32.totalorder %s26, 1
      %p56 = por %p54, %p55
      %p57 = scmp.ne.s32.totalorder %s46, %s47
      %p58 = scmp.eq.s32.totalorder %s26, 0
      %p59 = por %p57, %p58
      %p60 = scmp.ne.s32.totalorder %s46, %s47
      %p61 = scmp.eq.s32.totalorder %s27, 1
      %p62 = por %p60, %p61
      %p64 = scmp.ne.s32.totalorder %s47, %s63
      %p65 = scmp.eq.s32.totalorder %s27, 0
      %p66 = por %p64, %p65
      %s68 = sadd.s32 %s67, 1
      %p71 = scmp.eq.s32.totalorder %s21, 1
      %p72 = scmp.ne.s32.totalorder %s67, %s69
      %p73 = scmp.eq.s32.totalorder %s21, 0
      %p74 = por %p72, %p73
      %p75 = scmp.ne.s32.totalorder %s67, %s69
      %p76 = scmp.eq.s32.totalorder %s26, 1
      %p77 = por %p75, %p76
      %p78 = scmp.ne.s32.totalorder %s69, %s70
      %p79 = scmp.eq.s32.totalorder %s26, 0
      %p80 = por %p78, %p79
      %p81 = scmp.ne.s32.totalorder %s69, %s70
      %p82 = scmp.eq.s32.totalorder %s27, 1
      %p83 = por %p81, %p82
      %p85 = scmp.ne.s32.totalorder %s70, %s84
      %p86 = scmp.eq.s32.totalorder %s27, 0
      %p87 = por %p85, %p86
      %s88 = ssub.s32 %s29, %s36
      %p89 = scmp.eq.s32.totalorder %s88, 0
      %s91 = sadd.s32 %s90, 1
      %s92 = scalar_select %p89, %s90, %s91
      %p95 = pneg %p89
      %p96 = scmp.eq.s32.totalorder %s21, 1
      %p97 = por %p95, %p96
      %p98 = scmp.ne.s32.totalorder %s90, %s93
      %p99 = scmp.eq.s32.totalorder %s21, 0
      %p100 = por %p98, %p99
      %p101 = scmp.ne.s32.totalorder %s90, %s93
      %p102 = scmp.eq.s32.totalorder %s26, 1
      %p103 = por %p101, %p102
      %p104 = scmp.ne.s32.totalorder %s93, %s94
      %p105 = scmp.eq.s32.totalorder %s26, 0
      %p106 = por %p104, %p105
      %p107 = scmp.ne.s32.totalorder %s93, %s94
      %p108 = scmp.eq.s32.totalorder %s27, 1
      %p109 = por %p107, %p108
      %p111 = scmp.ne.s32.totalorder %s94, %s110
      %p112 = scmp.eq.s32.totalorder %s27, 0
      %p113 = por %p111, %p112
      %s115 = sadd.s32 %s114, 1
      %p118 = scmp.eq.s32.totalorder %s21, 1
      %p119 = scmp.ne.s32.totalorder %s114, %s116
      %p120 = scmp.eq.s32.totalorder %s21, 0
      %p121 = por %p119, %p120
      %p122 = scmp.ne.s32.totalorder %s114, %s116
      %p123 = scmp.eq.s32.totalorder %s26, 1
      %p124 = por %p122, %p123
      %p125 = scmp.ne.s32.totalorder %s116, %s117
      %p126 = scmp.eq.s32.totalorder %s26, 0
      %p127 = por %p125, %p126
      %p128 = scmp.ne.s32.totalorder %s116, %s117
      %p129 = scmp.eq.s32.totalorder %s27, 1
      %p130 = por %p128, %p129
      %p132 = scmp.ne.s32.totalorder %s117, %s131
      %p133 = scmp.eq.s32.totalorder %s27, 0
      %p134 = por %p132, %p133
      %s136 = sadd.s32 %s135, 1
      %p139 = scmp.eq.s32.totalorder %s21, 1
      %p140 = scmp.ne.s32.totalorder %s135, %s137
      %p141 = scmp.eq.s32.totalorder %s21, 0
      %p142 = por %p140, %p141
      %p143 = scmp.ne.s32.totalorder %s135, %s137
      %p144 = scmp.eq.s32.totalorder %s26, 1
      %p145 = por %p143, %p144
      %p146 = scmp.ne.s32.totalorder %s137, %s138
      %p147 = scmp.eq.s32.totalorder %s26, 0
      %p148 = por %p146, %p147
      %p149 = scmp.ne.s32.totalorder %s137, %s138
      %p150 = scmp.eq.s32.totalorder %s27, 1
      %p151 = por %p149, %p150
      %p153 = scmp.ne.s32.totalorder %s138, %s152
      %p154 = scmp.eq.s32.totalorder %s27, 0
      %p155 = por %p153, %p154
      %s157 = sadd.s32 %s156, 1
      %p160 = scmp.eq.s32.totalorder %s21, 1
      %p161 = scmp.ne.s32.totalorder %s156, %s158
      %p162 = scmp.eq.s32.totalorder %s21, 0
      %p163 = por %p161, %p162
      %p164 = scmp.ne.s32.totalorder %s156, %s158
      %p165 = scmp.eq.s32.totalorder %s26, 1
      %p166 = por %p164, %p165
      %p167 = scmp.ne.s32.totalorder %s158, %s159
      %p168 = scmp.eq.s32.totalorder %s26, 0
      %p169 = por %p167, %p168
      %p170 = scmp.ne.s32.totalorder %s158, %s159
      %p171 = scmp.eq.s32.totalorder %s27, 1
      %p172 = por %p170, %p171
      %p174 = scmp.ne.s32.totalorder %s159, %s173
      %p175 = scmp.eq.s32.totalorder %s27, 0
      %p176 = por %p174, %p175
      %s178 = sadd.s32 %s177, 1
      %p181 = scmp.eq.s32.totalorder %s21, 1
      %p182 = scmp.ne.s32.totalorder %s177, %s179
      %p183 = scmp.eq.s32.totalorder %s21, 0
      %p184 = por %p182, %p183
      %p185 = scmp.ne.s32.totalorder %s177, %s179
      %p186 = scmp.eq.s32.totalorder %s26, 1
      %p187 = por %p185, %p186
      %p188 = scmp.ne.s32.totalorder %s179, %s180
      %p189 = scmp.eq.s32.totalorder %s26, 0
      %p190 = por %p188, %p189
      %p191 = scmp.ne.s32.totalorder %s179, %s180
      %p192 = scmp.eq.s32.totalorder %s27, 1
      %p193 = por %p191, %p192
      %p195 = scmp.ne.s32.totalorder %s180, %s194
      %p196 = scmp.eq.s32.totalorder %s27, 0
      %p197 = por %p195, %p196
      %s199 = sadd.s32 %s198, 1
      %p202 = scmp.eq.s32.totalorder %s21, 1
      %p203 = scmp.ne.s32.totalorder %s198, %s200
      %p204 = scmp.eq.s32.totalorder %s21, 0
      %p205 = por %p203, %p204
      %p206 = scmp.ne.s32.totalorder %s198, %s200
      %p207 = scmp.eq.s32.totalorder %s26, 1
      %p208 = por %p206, %p207
      %p209 = scmp.ne.s32.totalorder %s200, %s201
      %p210 = scmp.eq.s32.totalorder %s26, 0
      %p211 = por %p209, %p210
      %p212 = scmp.ne.s32.totalorder %s200, %s201
      %p213 = scmp.eq.s32.totalorder %s27, 1
      %p214 = por %p212, %p213
      %p216 = scmp.ne.s32.totalorder %s201, %s215
      %p217 = scmp.eq.s32.totalorder %s27, 0
      %p218 = por %p216, %p217
      %s220 = sadd.s32 %s219, 1
      %p223 = scmp.eq.s32.totalorder %s21, 1
      %p224 = scmp.ne.s32.totalorder %s219, %s221
      %p225 = scmp.eq.s32.totalorder %s21, 0
      %p226 = por %p224, %p225
      %p227 = scmp.ne.s32.totalorder %s219, %s221
      %p228 = scmp.eq.s32.totalorder %s26, 1
      %p229 = por %p227, %p228
      %p230 = scmp.ne.s32.totalorder %s221, %s222
      %p231 = scmp.eq.s32.totalorder %s26, 0
      %p232 = por %p230, %p231
      %p233 = scmp.ne.s32.totalorder %s221, %s222
      %p234 = scmp.eq.s32.totalorder %s27, 1
      %p235 = por %p233, %p234
      %p237 = scmp.ne.s32.totalorder %s222, %s236
      %p238 = scmp.eq.s32.totalorder %s27, 0
      %p239 = por %p237, %p238
      %s241 = sadd.s32 %s240, 1
      %p244 = scmp.eq.s32.totalorder %s21, 1
      %p245 = scmp.ne.s32.totalorder %s240, %s242
      %p246 = scmp.eq.s32.totalorder %s21, 0
      %p247 = por %p245, %p246
      %p248 = scmp.ne.s32.totalorder %s240, %s242
      %p249 = scmp.eq.s32.totalorder %s26, 1
      %p250 = por %p248, %p249
      %p251 = scmp.ne.s32.totalorder %s242, %s243
      %p252 = scmp.eq.s32.totalorder %s26, 0
      %p253 = por %p251, %p252
      %p254 = scmp.ne.s32.totalorder %s242, %s243
      %p255 = scmp.eq.s32.totalorder %s27, 1
      %p256 = por %p254, %p255
      %p258 = scmp.ne.s32.totalorder %s243, %s257
      %p259 = scmp.eq.s32.totalorder %s27, 0
      %p260 = por %p258, %p259
      %s262 = sadd.s32 %s261, 1
      %p265 = scmp.eq.s32.totalorder %s21, 1
      %p266 = scmp.ne.s32.totalorder %s261, %s263
      %p267 = scmp.eq.s32.totalorder %s21, 0
      %p268 = por %p266, %p267
      %p269 = scmp.ne.s32.totalorder %s261, %s263
      %p270 = scmp.eq.s32.totalorder %s26, 1
      %p271 = por %p269, %p270
      %p272 = scmp.ne.s32.totalorder %s263, %s264
      %p273 = scmp.eq.s32.totalorder %s26, 0
      %p274 = por %p272, %p273
      %p275 = scmp.ne.s32.totalorder %s263, %s264
      %p276 = scmp.eq.s32.totalorder %s27, 1
      %p277 = por %p275, %p276
      %p279 = scmp.ne.s32.totalorder %s264, %s278
      %p280 = scmp.eq.s32.totalorder %s27, 0
      %p281 = por %p279, %p280
      %s282 = ssub.s32 %s28, %s40
      %s283 = ssub.s32 %s29, %s36
      %s284 = sor.u32 %s282, %s283
      %p285 = scmp.eq.s32.totalorder %s284, 0
      %s287 = sadd.s32 %s286, 1
      %s288 = scalar_select %p285, %s286, %s287
      %p291 = pneg %p285
      %p292 = scmp.eq.s32.totalorder %s21, 1
      %p293 = por %p291, %p292
      %p294 = scmp.ne.s32.totalorder %s286, %s289
      %p295 = scmp.eq.s32.totalorder %s21, 0
      %p296 = por %p294, %p295
      %p297 = scmp.ne.s32.totalorder %s286, %s289
      %p298 = scmp.eq.s32.totalorder %s26, 1
      %p299 = por %p297, %p298
      %p300 = scmp.ne.s32.totalorder %s289, %s290
      %p301 = scmp.eq.s32.totalorder %s26, 0
      %p302 = por %p300, %p301
      %p303 = scmp.ne.s32.totalorder %s289, %s290
      %p304 = scmp.eq.s32.totalorder %s27, 1
      %p305 = por %p303, %p304
      %p307 = scmp.ne.s32.totalorder %s290, %s306
      %p308 = scmp.eq.s32.totalorder %s27, 0
      %p309 = por %p307, %p308
      %p310 = scmp.le.s32.totalorder 1, %s21
      %p311 = scmp.lt.s32.totalorder %s21, 3
      %p312 = pnand %p310, %p311
      %p313 = pneg %p312
      // Predicated region
      $region9: #{tpu_custom_call.1} parent=5 // pred_check
        _
      $region10: #{tpu_custom_call.1} parent=5 // pred_check_branch
        %315 = sbr.rel (%p312) target = $region12
      $region11: #{tpu_custom_call.1} parent=5 // pred_region
        %s316 = ssub.s32 %s21, 1
        // Predicated region
        $region13: #{tpu_custom_call.1} parent=11 // pred_check
          %p317 = pneg %p80
        $region14: #{tpu_custom_call.1} parent=11 // pred_check_branch
          %319 = sbr.rel (%p317) target = $region16
        $region15: #{tpu_custom_call.1} parent=11 // pred_region
          _
        $region16: #{tpu_custom_call.1} parent=11 // pred_fallthru
          _
        // Predicated region
        $region17: #{tpu_custom_call.1} parent=11 // pred_check
          %p320 = pneg %p106
        $region18: #{tpu_custom_call.1} parent=11 // pred_check_branch
          %322 = sbr.rel (%p320) target = $region20
        $region19: #{tpu_custom_call.1} parent=11 // pred_region
          %324 = vsyncadd [#allocation4], 0
          %s325 = smul.addr %s31, 4
          %s326 = scalar_lea.hbm %s2, %s325
          %s328 = sshll.u32 %s326, 4
          %s329 = int_to_ptr.hbm [resolvable:$true] %s328
          %s330 = sshll.u32 [#allocation3], 4
          %s331 = int_to_ptr.vmem [resolvable:$true] %s330
          %333 = dma.hbm_to_vmem [thread:$0]  %s329, 64, %s331, [#allocation4]
        $region20: #{tpu_custom_call.1} parent=11 // pred_fallthru
          _
        // Predicated region
        $region21: #{tpu_custom_call.1} parent=11 // pred_check
          %p334 = pneg %p127
        $region22: #{tpu_custom_call.1} parent=11 // pred_check_branch
          %336 = sbr.rel (%p334) target = $region24
        $region23: #{tpu_custom_call.1} parent=11 // pred_region
          _
        $region24: #{tpu_custom_call.1} parent=11 // pred_fallthru
          _
        // Predicated region
        $region25: #{tpu_custom_call.1} parent=11 // pred_check
          %p337 = pneg %p148
        $region26: #{tpu_custom_call.1} parent=11 // pred_check_branch
          %339 = sbr.rel (%p337) target = $region28
        $region27: #{tpu_custom_call.1} parent=11 // pred_region
          _
        $region28: #{tpu_custom_call.1} parent=11 // pred_fallthru
          _
        // Predicated region
        $region29: #{tpu_custom_call.1} parent=11 // pred_check
          %p340 = pneg %p169
        $region30: #{tpu_custom_call.1} parent=11 // pred_check_branch
          %342 = sbr.rel (%p340) target = $region32
        $region31: #{tpu_custom_call.1} parent=11 // pred_region
          _
        $region32: #{tpu_custom_call.1} parent=11 // pred_fallthru
          _
        // Predicated region
        $region33: #{tpu_custom_call.1} parent=11 // pred_check
          %p343 = pneg %p190
        $region34: #{tpu_custom_call.1} parent=11 // pred_check_branch
          %345 = sbr.rel (%p343) target = $region36
        $region35: #{tpu_custom_call.1} parent=11 // pred_region
          _
        $region36: #{tpu_custom_call.1} parent=11 // pred_fallthru
          _
        // Predicated region
        $region37: #{tpu_custom_call.1} parent=11 // pred_check
          %p346 = pneg %p211
        $region38: #{tpu_custom_call.1} parent=11 // pred_check_branch
          %348 = sbr.rel (%p346) target = $region40
        $region39: #{tpu_custom_call.1} parent=11 // pred_region
          _
        $region40: #{tpu_custom_call.1} parent=11 // pred_fallthru
          _
        // Predicated region
        $region41: #{tpu_custom_call.1} parent=11 // pred_check
          %p349 = pneg %p232
        $region42: #{tpu_custom_call.1} parent=11 // pred_check_branch
          %351 = sbr.rel (%p349) target = $region44
        $region43: #{tpu_custom_call.1} parent=11 // pred_region
          _
        $region44: #{tpu_custom_call.1} parent=11 // pred_fallthru
          _
        // Predicated region
        $region45: #{tpu_custom_call.1} parent=11 // pred_check
          %p352 = pneg %p253
        $region46: #{tpu_custom_call.1} parent=11 // pred_check_branch
          %354 = sbr.rel (%p352) target = $region48
        $region47: #{tpu_custom_call.1} parent=11 // pred_region
          _
        $region48: #{tpu_custom_call.1} parent=11 // pred_fallthru
          _
        // Predicated region
        $region49: #{tpu_custom_call.1} parent=11 // pred_check
          %p355 = pneg %p274
        $region50: #{tpu_custom_call.1} parent=11 // pred_check_branch
          %357 = sbr.rel (%p355) target = $region52
        $region51: #{tpu_custom_call.1} parent=11 // pred_region
          _
        $region52: #{tpu_custom_call.1} parent=11 // pred_fallthru
          _
      $region12: #{tpu_custom_call.1} parent=5 // pred_fallthru
        _
      %p358 = scmp.lt.s32.totalorder %s21, 2
      // Predicated region
      $region53: #{tpu_custom_call.1} parent=5 // pred_check
        %p359 = pneg %p358
      $region54: #{tpu_custom_call.1} parent=5 // pred_check_branch
        %361 = sbr.rel (%p359) target = $region56
      $region55: #{tpu_custom_call.1} parent=5 // pred_region
        // Predicated region
        $region57: #{tpu_custom_call.1} parent=55 // pred_check
          %p362 = pneg %p53
        $region58: #{tpu_custom_call.1} parent=55 // pred_check_branch
          %364 = sbr.rel (%p362) target = $region60
        $region59: #{tpu_custom_call.1} parent=55 // pred_region
          %p365 = scmp.lt.s32.totalorder %s28, 1
          %s366 = scalar_select %p365, %s28, 1
          %s367 = smul.addr %s366, 8
          %s368 = scalar_lea.vmem %s0, %s367
        $region60: #{tpu_custom_call.1} parent=55 // pred_fallthru
          _
      $region56: #{tpu_custom_call.1} parent=5 // pred_fallthru
        _
      %p369 = scmp.le.s32.totalorder 1, %s21
      %p370 = scmp.lt.s32.totalorder %s21, 3
      %p371 = pnand %p369, %p370
      %p372 = pneg %p371
      // Predicated region
      $region61: #{tpu_custom_call.1} parent=5 // pred_check
        _
      $region62: #{tpu_custom_call.1} parent=5 // pred_check_branch
        %374 = sbr.rel (%p371) target = $region64
      $region63: #{tpu_custom_call.1} parent=5 // pred_region
        %s375 = ssub.s32 %s21, 1
        // Predicated region
        $region65: #{tpu_custom_call.1} parent=63 // pred_check
          %p376 = pneg %p106
        $region66: #{tpu_custom_call.1} parent=63 // pred_check_branch
          %378 = sbr.rel (%p376) target = $region68
        $region67: #{tpu_custom_call.1} parent=63 // pred_region
          %380 = dma.done [#allocation4], 64
        $region68: #{tpu_custom_call.1} parent=63 // pred_fallthru
          _
        %p381 = scmp.lt.s32.totalorder %s30, 1
        %s382 = scalar_select %p381, %s30, 1
        %s383 = smul.addr %s382, 8
        %s384 = scalar_lea.vmem %s0, %s383
        %p385 = pneg %p59
        %p386 = pneg %p56
        %p387 = pneg %p80
        %p388 = pneg %p77
        %p389 = pneg %p106
        %p390 = pneg %p103
        %p391 = pneg %p127
        %p392 = pneg %p124
        %p393 = pneg %p148
        %p394 = pneg %p145
        %p395 = pneg %p169
        %p396 = pneg %p166
        %p397 = pneg %p190
        %p398 = pneg %p187
        %p399 = pneg %p211
        %p400 = pneg %p208
        %p401 = pneg %p232
        %p402 = pneg %p229
        %p403 = pneg %p253
        %p404 = pneg %p250
        %p405 = pneg %p274
        %p406 = pneg %p271
        %p407 = pneg %p302
        %p408 = pneg %p299
        %s409 = sand.u32 %s289, 1
        %s410 = scalar_lea.sflag [#allocation5], %s409
        %s411 = sand.u32 %s289, 1
        %s412 = smul.addr %s411, 8
        %s413 = scalar_lea.vmem [#allocation6], %s412
        %p414 = scmp.lt.s32.totalorder %s30, 1
        %s415 = scalar_select %p414, %s30, 1
        %s416 = smul.addr %s415, 8
        %s417 = scalar_lea.vmem %s0, %s416
        %p419 = scmp.eq.s32.totalorder %s31, 0
        // Predicated region
        $region69: #{tpu_custom_call.1} parent=63 // pred_check
          %p420 = pneg %p419
        $region70: #{tpu_custom_call.1} parent=63 // pred_check_branch
          %422 = sbr.rel (%p420) target = $region72
        $region71: #{tpu_custom_call.1} parent=63 // pred_region
          %v423 = vld [vmem:[%s417] sm:$0xff]
          %v424 = vpack.c.bf16 %v423, %v423
          %v425 = vld [vmem:[%s1] sm:$0xf]
          %v426 = vld [vmem:[%s1 + $0x4] sm:$0xf]
          %v427 = vld [vmem:[%s1 + $0x8] sm:$0xf]
          %v428 = vld [vmem:[%s1 + $0xc] sm:$0xf]
          %v433 = vunpack.c.l.b16 %v425
          %v434 = vunpack.c.l.b16 %v426
          %v435 = vunpack.c.l.b16 %v427
          %v436 = vunpack.c.l.b16 %v428
          %v437 = vpack.c.b16 %v434, %v433
          %v438 = vpack.c.b16 %v436, %v435
          %vm441 = vcmask 261120
          %v443 = vsel %vm441, %v424, 0
          %445 = vmatpush.bf16.msra.mxu0 0
          %446 = vmatpush.bf16.msra.mxu0 0
          %447 = vmatpush.bf16.msra.mxu0 0
          %448 = vmatpush.bf16.msra.mxu0 0
          %449 = vmatpush.bf16.msra.mxu0 0
          %450 = vmatpush.bf16.msra.mxu0 0
          %451 = vmatpush.bf16.msra.mxu0 %v438
          %452 = vmatpush.bf16.msra.mxu0 %v437
          %453 = vmatmul.bf16.gmra.mxu0 %v443
          %v454 = vpop.f32.mrf.mxu0
          %v455 = vadd.f32 0.0, %v454
          %v456 = vpop.f32.mrf.mxu0
          %457 = vdwg.mxu0
          %v458 = vpack.c.bf16 %v455, %v455
          %vm459 = vcmask 257024
          %460 = vst.msk [vmem:[#allocation2] sm:$0xf] %vm459, %v458
          %462 = vrot.lane.b32.xlu0 %v458, 96
          %v463 = vpop.permute.xlu0 %462
          %465 = vst.msk [vmem:[#allocation2 + $0x4] sm:$0xf] %vm459, %v463
        $region72: #{tpu_custom_call.1} parent=63 // pred_fallthru
          _
        %v466 = vld [vmem:[#allocation3] sm:$0xf]
        %v467 = vld [vmem:[#allocation2] sm:$0xf]
        %v468 = vld [vmem:[#allocation2 + $0x4] sm:$0xf]
        %s469 = smul.u32 %s31, 8
        %s470 = scalar_lea.vmem %s417, %s469
        %v471 = vld [vmem:[%s470] sm:$0xff]
        %v474 = vunpack.c.l.b16 %v467
        %v475 = vunpack.c.l.b16 %v468
        %v476 = vpack.c.b16 %v475, %v474
        %vm478 = vcmask 130048
        %v480 = vsel %vm478, %v466, 0
        %482 = vmatpush.bf16.msra.mxu0 0
        %483 = vmatpush.bf16.msra.mxu0 0
        %484 = vmatpush.bf16.msra.mxu0 0
        %485 = vmatpush.bf16.msra.mxu0 0
        %486 = vmatpush.bf16.msra.mxu0 0
        %487 = vmatpush.bf16.msra.mxu0 0
        %488 = vmatpush.bf16.msra.mxu0 0
        %489 = vmatpush.bf16.msra.mxu0 %v476
        %490 = vmatmul.bf16.gmra.mxu0 %v480
        %v491 = vpop.f32.mrf.mxu0
        %v492 = vadd.f32 %v471, %v491
        %v493 = vpop.f32.mrf.mxu0
        %494 = vdwg.mxu0
        %v495 = vld [vmem:[%s7] sm:$0x1]
        %v496 = vld [vmem:[%s8] sm:$0x1]
        %vm497 = vcmask 261120
        %v498 = vsel %vm497, %v492, 0.0
        %499 = vadd.xlane.f32.xlu0 %v498
        %v500 = vpop.xlane.xlu0 %499
        %v501 = vrcp.pop 32.0
        %v502 = vmul.f32 32.0, %v501
        %v503 = vsub.f32 1.0, %v502
        %v504 = vmul.f32 %v501, %v503
        %v505 = vadd.f32 %v501, %v504
        %vm506 = vweird.f32 %v501
        %v507 = vsel %vm506, %v501, %v505
        %v508 = vmul.f32 %v500, %v507
        %v509 = vsub.f32 %v492, %v508
        %v510 = vmul.f32 %v509, %v509
        %v511 = vsel %vm497, %v510, 0.0
        %512 = vadd.xlane.f32.xlu0 %v511
        %v513 = vpop.xlane.xlu0 %512
        %v514 = vmul.f32 %v513, %v507
        %v515 = vadd.f32 %v514, 1e-12
        %v516 = vrsqrt.pop %v515
        %v517 = vmul.f32 %v516, %v515
        %v518 = vmul.f32 %v517, %v516
        %v519 = vmul.f32 0.5, %v518
        %v520 = vsub.f32 1.5, %v519
        %v521 = vmul.f32 %v516, %v520
        %vm522 = vweird.f32 %v515
        %vm523 = vweird.f32 %v516
        %vm524 = vmor %vm522, %vm523
        %v525 = vsel %vm524, %v516, %v521
        %v526 = vmul.f32 %v509, %v525
        %v528 = vperm.slane %v495, 0
        %v530 = vmul.f32 %v526, %v528
        %v532 = vperm.slane %v496, 0
        %v534 = vadd.f32 %v530, %v532
        %v535 = vpack.c.bf16 %v534, %v534
        %v536 = vld [vmem:[%s3] sm:$0xf]
        %v537 = vld [vmem:[%s3 + $0x4] sm:$0xf]
        %v538 = vld [vmem:[%s3 + $0x8] sm:$0xf]
        %v539 = vld [vmem:[%s3 + $0xc] sm:$0xf]
        %v540 = vld [vmem:[%s4] sm:$0x1]
        %v542 = vperm.slane %v540, 0
        %v548 = vunpack.c.l.b16 %v536
        %v549 = vunpack.c.l.b16 %v537
        %v550 = vunpack.c.l.b16 %v538
        %v551 = vunpack.c.l.b16 %v539
        %v552 = vpack.c.b16 %v549, %v548
        %v553 = vpack.c.b16 %v551, %v550
        %v557 = vsel %vm497, %v535, 0
        %559 = vmatpush.bf16.msra.mxu0 0
        %560 = vmatpush.bf16.msra.mxu0 0
        %561 = vmatpush.bf16.msra.mxu0 0
        %562 = vmatpush.bf16.msra.mxu0 0
        %563 = vmatpush.bf16.msra.mxu0 0
        %564 = vmatpush.bf16.msra.mxu0 0
        %565 = vmatpush.bf16.msra.mxu0 %v553
        %566 = vmatpush.bf16.msra.mxu0 %v552
        %567 = vmatmul.bf16.gmra.mxu0 %v557
        %v568 = vpop.f32.mrf.mxu0
        %v569 = vadd.f32 %v542, %v568
        %v570 = vpop.f32.mrf.mxu0
        %571 = vdwg.mxu0
        %v572 = vmul.f32 %v569, %v569
        %v573 = vmul.f32 %v569, %v572
        %v574 = vmul.f32 %v573, 0.044715
        %v575 = vadd.f32 %v569, %v574
        %v576 = vmul.f32 %v575, 0.7978846
        %v577 = vtanh.pop %v576
        %v578 = vadd.f32 %v577, 1.0
        %v579 = vmul.f32 %v578, 0.5
        %v580 = vmul.f32 %v569, %v579
        %v581 = vpack.c.bf16 %v580, %v580
        %v582 = vld [vmem:[%s5] sm:$0xf]
        %v583 = vld [vmem:[%s5 + $0x4] sm:$0xf]
        %v584 = vld [vmem:[%s5 + $0x8] sm:$0xf]
        %v585 = vld [vmem:[%s5 + $0xc] sm:$0xf]
        %v586 = vld [vmem:[%s5 + $0x10] sm:$0xf]
        %v587 = vld [vmem:[%s5 + $0x14] sm:$0xf]
        %v588 = vld [vmem:[%s5 + $0x18] sm:$0xf]
        %v589 = vld [vmem:[%s5 + $0x1c] sm:$0xf]
        %v590 = vld [vmem:[%s6] sm:$0x1]
        %v592 = vperm.slane %v590, 0
        %v602 = vunpack.c.l.b16 %v582
        %v603 = vunpack.c.l.b16 %v583
        %v604 = vunpack.c.l.b16 %v584
        %v605 = vunpack.c.l.b16 %v585
        %v606 = vunpack.c.l.b16 %v586
        %v607 = vunpack.c.l.b16 %v587
        %v608 = vunpack.c.l.b16 %v588
        %v609 = vunpack.c.l.b16 %v589
        %v610 = vpack.c.b16 %v603, %v602
        %v611 = vpack.c.b16 %v605, %v604
        %v612 = vpack.c.b16 %v607, %v606
        %v613 = vpack.c.b16 %v609, %v608
        %vm618 = vcmask 523264
        %v620 = vsel %vm618, %v581, 0
        %622 = vmatpush.bf16.msra.mxu0 0
        %623 = vmatpush.bf16.msra.mxu0 0
        %624 = vmatpush.bf16.msra.mxu0 0
        %625 = vmatpush.bf16.msra.mxu0 0
        %626 = vmatpush.bf16.msra.mxu0 %v613
        %627 = vmatpush.bf16.msra.mxu0 %v612
        %628 = vmatpush.bf16.msra.mxu0 %v611
        %629 = vmatpush.bf16.msra.mxu0 %v610
        %630 = vmatmul.bf16.gmra.mxu0 %v620
        %v631 = vpop.f32.mrf.mxu0
        %v632 = vadd.f32 %v592, %v631
        %v633 = vpop.f32.mrf.mxu0
        %634 = vdwg.mxu0
        %v635 = vadd.f32 %v632, %v534
        %v636 = vld [vmem:[%s9] sm:$0x1]
        %v637 = vld [vmem:[%s10] sm:$0x1]
        %v638 = vsel %vm497, %v635, 0.0
        %639 = vadd.xlane.f32.xlu0 %v638
        %v640 = vpop.xlane.xlu0 %639
        %v641 = vmul.f32 %v640, %v507
        %v642 = vsub.f32 %v635, %v641
        %v643 = vmul.f32 %v642, %v642
        %v644 = vsel %vm497, %v643, 0.0
        %645 = vadd.xlane.f32.xlu0 %v644
        %v646 = vpop.xlane.xlu0 %645
        %v647 = vmul.f32 %v646, %v507
        %v648 = vadd.f32 %v647, 1e-12
        %v649 = vrsqrt.pop %v648
        %v650 = vmul.f32 %v649, %v648
        %v651 = vmul.f32 %v650, %v649
        %v652 = vmul.f32 0.5, %v651
        %v653 = vsub.f32 1.5, %v652
        %v654 = vmul.f32 %v649, %v653
        %vm655 = vweird.f32 %v648
        %vm656 = vweird.f32 %v649
        %vm657 = vmor %vm655, %vm656
        %v658 = vsel %vm657, %v649, %v654
        %v659 = vmul.f32 %v642, %v658
        %v661 = vperm.slane %v636, 0
        %v663 = vmul.f32 %v659, %v661
        %v665 = vperm.slane %v637, 0
        %v667 = vadd.f32 %v663, %v665
        %668 = vst.msk [vmem:[%s413] sm:$0xff] %vm497, %v667
        %s669 = sand.u32 %s289, 1
        %s670 = scalar_lea.sflag [#allocation5], %s669
        %s671 = sand.u32 %s289, 1
        %s672 = smul.addr %s671, 8
        %s673 = scalar_lea.vmem [#allocation6], %s672
        // Predicated region
        $region73: #{tpu_custom_call.1} parent=63 // pred_check
          %p674 = pneg %p299
        $region74: #{tpu_custom_call.1} parent=63 // pred_check_branch
          %676 = sbr.rel (%p674) target = $region76
        $region75: #{tpu_custom_call.1} parent=63 // pred_region
          %678 = vsyncadd %s670, 0
          %s679 = sadd.s32 %s31, %s30
          %s680 = smul.addr %s679, 8
          %s681 = scalar_lea.hbm %s11, %s680
          %s683 = sshll.u32 %s673, 4
          %s684 = int_to_ptr.vmem [resolvable:$true] %s683
          %s685 = sshll.u32 %s681, 4
          %s686 = int_to_ptr.hbm [resolvable:$true] %s685
          %688 = dma.vmem_to_hbm [thread:$0]  %s684, 128, %s686, %s670
        $region76: #{tpu_custom_call.1} parent=63 // pred_fallthru
          _
      $region64: #{tpu_custom_call.1} parent=5 // pred_fallthru
        _
      %p689 = scmp.le.s32.totalorder 2, %s21
      // Predicated region
      $region77: #{tpu_custom_call.1} parent=5 // pred_check
        %p690 = pneg %p689
      $region78: #{tpu_custom_call.1} parent=5 // pred_check_branch
        %692 = sbr.rel (%p690) target = $region80
      $region79: #{tpu_custom_call.1} parent=5 // pred_region
        %s693 = ssub.s32 %s21, 2
        // Predicated region
        $region81: #{tpu_custom_call.1} parent=79 // pred_check
          %p694 = pneg %p305
        $region82: #{tpu_custom_call.1} parent=79 // pred_check_branch
          %696 = sbr.rel (%p694) target = $region84
        $region83: #{tpu_custom_call.1} parent=79 // pred_region
          %s697 = sand.u32 %s290, 1
          %s698 = scalar_lea.sflag [#allocation5], %s697
          %s699 = sand.u32 %s290, 1
          %s700 = smul.addr %s699, 8
          %s701 = scalar_lea.vmem [#allocation6], %s700
          %703 = dma.done %s698, 128
        $region84: #{tpu_custom_call.1} parent=79 // pred_fallthru
          _
      $region80: #{tpu_custom_call.1} parent=5 // pred_fallthru
        _
    $region6: #{tpu_custom_call.1} parent=1 // loop_footer
      %s25 = sadd.s32 1, %s21
    $region7: #{tpu_custom_call.1} parent=1 // loop_footer_branch
      %20 = sbr.rel target = $region3
    $region8: #{tpu_custom_call.1} parent=1 // loop_exit
      _
    %704 = vsyncpa [#allocation4], 1
    %s705 = scalar_lea.sflag [#allocation4], 1
    %706 = vsyncpa %s705, 1
    %707 = vsyncpa [#allocation5], 1
    %s708 = scalar_lea.sflag [#allocation5], 1
    %709 = vsyncpa %s708, 1

</llo_original>
